<compile_context>
chip_gen: v5e
topology: v5e:2x2
jax: 0.10.0
libtpu: 0.0.40
codegen_flags: <defaults>
</compile_context>

<pallas_src>
import functools
import math

import jax
import jax.numpy as jnp
from jax.experimental import pallas as pl
from jax.experimental.pallas import tpu as pltpu


MXU_DTYPE = jnp.bfloat16  # matmul operand dtype (accumulation is always f32)


# ---------------------------------------------------------------------------
# Whole Encoder stack as a single grid-less Pallas kernel.  Every input lives
# whole in VMEM; the layer loop is a fully unrolled Python loop; the (B*S, H)
# activation is carried as a plain value between layers.
# ---------------------------------------------------------------------------
def encoder_stack_kernel(
    x_ref, bias_ref,
    wqkv_ref, bqkv_ref, wo_ref, w1_ref, b1_ref, w2_ref, vec_ref,
    o_ref,
    *, n_layers, n_heads, head_dim, inv_scale,
):
    B, S, H = x_ref.shape
    x = x_ref[...].reshape(B * S, H)        # leading-dim collapse (pure relabel), f32
    attn_bias = bias_ref[...]               # (T, T), T = B*n_heads*S, precomputed additive mask

    for layer in range(n_layers):           # all layers resident -> static unrolled loop
        # Packed per-layer vectors: [bo, ln1_g, ln1_b, b2, ln2_g, ln2_b]  (6, H) f32.
        vecs = vec_ref[layer]
        bo, ln1_g, ln1_b = vecs[0:1, :], vecs[1:2, :], vecs[2:3, :]
        b2, ln2_g, ln2_b = vecs[3:4, :], vecs[4:5, :], vecs[5:6, :]

        # ---- fused QKV projection: one wide (B*S, 3H) MXU matmul ---------------
        qkv = jnp.dot(x.astype(MXU_DTYPE), wqkv_ref[layer],
                      preferred_element_type=jnp.float32) + bqkv_ref[layer]

        # ---- pack heads block-diagonally: rows ordered (b, h, s) ---------------
        # Only static slices + axis-0 concatenation (sublane stacking) -> robust.
        q_parts, k_parts, v_parts = [], [], []
        for b in range(B):
            r = b * S
            for h in range(n_heads):
                c = h * head_dim
                q_parts.append(qkv[r:r + S, c:c + head_dim])
                k_parts.append(qkv[r:r + S, H + c:H + c + head_dim])
                v_parts.append(qkv[r:r + S, 2 * H + c:2 * H + c + head_dim])
        q_p = (jnp.concatenate(q_parts, axis=0) * inv_scale).astype(MXU_DTYPE)  # (T, hd)
        k_p = jnp.concatenate(k_parts, axis=0).astype(MXU_DTYPE)                # (T, hd)
        v_p = jnp.concatenate(v_parts, axis=0).astype(MXU_DTYPE)                # (T, hd)

        # ---- attention = two plain 2-D matmuls + masked softmax ----------------
        # energy[i, j] = q_p[i] . k_p[j]   ('qd,kd->qk')
        energy = jax.lax.dot_general(q_p, k_p, (((1,), (1,)), ((), ())),
                                     preferred_element_type=jnp.float32)        # (T, T)
        energy = energy + attn_bias        # block-diagonal + key-padding bias (-1e10 elsewhere)
        m = jnp.max(energy, axis=-1, keepdims=True)
        p = jnp.exp(energy - m)
        attn = p / jnp.sum(p, axis=-1, keepdims=True)   # exact softmax (matches reference)
        ctx = jnp.dot(attn.astype(MXU_DTYPE), v_p,
                      preferred_element_type=jnp.float32)                        # (T, hd)

        # ---- unpack (b,h,s) rows back to (b,s) rows x (h,d) columns ------------
        rows = []
        for b in range(B):
            blocks = [ctx[(b * n_heads + h) * S:(b * n_heads + h + 1) * S, :]
                      for h in range(n_heads)]
            rows.append(jnp.concatenate(blocks, axis=1))   # (S, H) lane concat
        ctx2d = jnp.concatenate(rows, axis=0)              # (B*S, H) sublane concat

        # ---- single output projection with the un-split (H, H) Wo --------------
        attn_out = jnp.dot(ctx2d.astype(MXU_DTYPE), wo_ref[layer],
                           preferred_element_type=jnp.float32) + bo

        # ---- residual + LayerNorm 1 (f32) ---------------------------------------
        y = x + attn_out
        mu = jnp.mean(y, axis=-1, keepdims=True)
        var = jnp.mean((y - mu) ** 2, axis=-1, keepdims=True)
        y = (y - mu) * jax.lax.rsqrt(var + 1e-5) * ln1_g + ln1_b

        # ---- position-wise feedforward ------------------------------------------
        f = jnp.dot(y.astype(MXU_DTYPE), w1_ref[layer],
                    preferred_element_type=jnp.float32) + b1_ref[layer]
        f = jnp.maximum(f, 0.0)
        f = jnp.dot(f.astype(MXU_DTYPE), w2_ref[layer],
                    preferred_element_type=jnp.float32) + b2

        # ---- residual + LayerNorm 2 (f32) ---------------------------------------
        z = y + f
        mu2 = jnp.mean(z, axis=-1, keepdims=True)
        var2 = jnp.mean((z - mu2) ** 2, axis=-1, keepdims=True)
        x = (z - mu2) * jax.lax.rsqrt(var2 + 1e-5) * ln2_g + ln2_b

    o_ref[...] = x.reshape(B, S, H).astype(o_ref.dtype)


def make_encoder_call(B, S, H, n_heads, n_layers, n_inputs):
    head_dim = H // n_heads
    kernel = functools.partial(
        encoder_stack_kernel,
        n_layers=n_layers,
        n_heads=n_heads,
        head_dim=head_dim,
        inv_scale=1.0 / math.sqrt(head_dim),
    )
    vmem = pl.BlockSpec(memory_space=pltpu.MemorySpace.VMEM)   # whole array resident in VMEM
    return pl.pallas_call(
        kernel,
        out_shape=jax.ShapeDtypeStruct((B, S, H), jnp.float32),
        in_specs=[vmem] * n_inputs,
        out_specs=vmem,
    )


# ---------------------------------------------------------------------------
# Wrapper-side helpers (plain JAX glue).
# ---------------------------------------------------------------------------
def build_attn_bias(src_mask, n_heads):
    """Additive attention bias for the (b, h, s)-packed layout.

    bias[i, j] = 0 if row i and column j are in the same (batch, head) block AND
    key position j is not padded; else -1e10.  Robust to int or float masks.
    """
    B, S = src_mask.shape
    T = B * n_heads * S
    idx = jnp.arange(T)
    b_idx = idx // (n_heads * S)
    h_idx = (idx // S) % n_heads
    s_idx = idx % S
    same_block = (b_idx[:, None] == b_idx[None, :]) & (h_idx[:, None] == h_idx[None, :])
    key_ok = src_mask[b_idx, s_idx] != 0
    allowed = same_block & key_ok[None, :]
    return jnp.where(allowed, 0.0, -1e10).astype(jnp.float32)


def init_params(key, input_dim, hid_dim, n_layers, n_heads, pf_dim, max_length):
    keys = jax.random.split(key, 2 + n_layers)
    params = {
        "tok_emb": jax.random.normal(keys[0], (input_dim, hid_dim), jnp.float32) * 0.05,
        "pos_emb": jax.random.normal(keys[1], (max_length, hid_dim), jnp.float32) * 0.05,
        "layers": [],
    }
    for li in range(n_layers):
        lk = jax.random.split(keys[2 + li], 12)
        layer = {
            "wq": jax.random.normal(lk[0], (hid_dim, hid_dim), jnp.float32) * 0.05,
            "bq": jax.random.normal(lk[1], (1, hid_dim), jnp.float32) * 0.02,
            "wk": jax.random.normal(lk[2], (hid_dim, hid_dim), jnp.float32) * 0.05,
            "bk": jax.random.normal(lk[3], (1, hid_dim), jnp.float32) * 0.02,
            "wv": jax.random.normal(lk[4], (hid_dim, hid_dim), jnp.float32) * 0.05,
            "bv": jax.random.normal(lk[5], (1, hid_dim), jnp.float32) * 0.02,
            "wo": jax.random.normal(lk[6], (hid_dim, hid_dim), jnp.float32) * 0.05,
            "bo": jax.random.normal(lk[7], (1, hid_dim), jnp.float32) * 0.02,
            "ln1_g": jnp.ones((1, hid_dim), jnp.float32),
            "ln1_b": jnp.zeros((1, hid_dim), jnp.float32),
            "w1": jax.random.normal(lk[8], (hid_dim, pf_dim), jnp.float32) * 0.05,
            "b1": jax.random.normal(lk[9], (1, pf_dim), jnp.float32) * 0.02,
            "w2": jax.random.normal(lk[10], (pf_dim, hid_dim), jnp.float32) * 0.05,
            "b2": jax.random.normal(lk[11], (1, hid_dim), jnp.float32) * 0.02,
            "ln2_g": jnp.ones((1, hid_dim), jnp.float32),
            "ln2_b": jnp.zeros((1, hid_dim), jnp.float32),
        }
        params["layers"].append(layer)
    return params


def pack_params(params, mxu_dtype=MXU_DTYPE):
    """Stack per-layer weights along a leading layer axis; fuse QKV; pack small vectors."""
    def stack(fn):
        return jnp.stack([fn(p) for p in params["layers"]])

    return {
        "wqkv": stack(lambda p: jnp.concatenate([p["wq"], p["wk"], p["wv"]], axis=1)).astype(mxu_dtype),
        "bqkv": stack(lambda p: jnp.concatenate([p["bq"], p["bk"], p["bv"]], axis=1)),
        "wo": stack(lambda p: p["wo"]).astype(mxu_dtype),            # un-split (H, H)
        "w1": stack(lambda p: p["w1"]).astype(mxu_dtype),
        "b1": stack(lambda p: p["b1"]),
        "w2": stack(lambda p: p["w2"]).astype(mxu_dtype),
        "vec": stack(lambda p: jnp.concatenate(
            [p["bo"], p["ln1_g"], p["ln1_b"], p["b2"], p["ln2_g"], p["ln2_b"]], axis=0)),
    }


def encoder_forward(src_tokens, src_mask, params, packed, n_heads):
    B, S = src_tokens.shape
    H = params["tok_emb"].shape[1]
    L = len(params["layers"])
    # Embedding gather + scale + positional add (glue, plain JAX).
    # TODO(synk): embedding / attention / residual dropouts are eval-mode identity.
    x = params["tok_emb"][src_tokens] * jnp.sqrt(jnp.float32(H)) \
        + params["pos_emb"][jnp.arange(S)][None, :, :]
    attn_bias = build_attn_bias(src_mask, n_heads)     # hoisted out of the kernel hot loop
    call = make_encoder_call(B, S, H, n_heads, L, n_inputs=9)
    return call(x, attn_bias, packed["wqkv"], packed["bqkv"], packed["wo"],
                packed["w1"], packed["b1"], packed["w2"], packed["vec"])


# ---------------------------------------------------------------------------
# Pure-JAX reference mirroring the PyTorch formulation (reshape/permute heads),
# with the same bf16-operand / f32-accumulate matmul precision as the kernel.
# ---------------------------------------------------------------------------
def ref_encoder(src_tokens, src_mask, params, n_heads, mxu_dtype=MXU_DTYPE):
    B, S = src_tokens.shape
    H = params["tok_emb"].shape[1]
    hd = H // n_heads

    def mm(a, b):
        return jnp.dot(a.astype(mxu_dtype), b.astype(mxu_dtype),
                       preferred_element_type=jnp.float32)

    x = params["tok_emb"][src_tokens] * jnp.sqrt(jnp.float32(H)) \
        + params["pos_emb"][jnp.arange(S)][None]
    for p in params["layers"]:
        q = (mm(x, p["wq"]) + p["bq"]) / jnp.sqrt(jnp.float32(hd))
        k = mm(x, p["wk"]) + p["bk"]
        v = mm(x, p["wv"]) + p["bv"]
        q = q.reshape(B, S, n_heads, hd).transpose(0, 2, 1, 3)
        k = k.reshape(B, S, n_heads, hd).transpose(0, 2, 1, 3)
        v = v.reshape(B, S, n_heads, hd).transpose(0, 2, 1, 3)
        energy = jnp.einsum("bhqd,bhkd->bhqk", q.astype(mxu_dtype), k.astype(mxu_dtype),
                            preferred_element_type=jnp.float32)
        energy = jnp.where(src_mask[:, None, None, :] == 0, -1e10, energy)
        attn = jax.nn.softmax(energy, axis=-1)
        ctx = jnp.einsum("bhqk,bhkd->bhqd", attn.astype(mxu_dtype), v.astype(mxu_dtype),
                         preferred_element_type=jnp.float32)
        a = ctx.transpose(0, 2, 1, 3).reshape(B, S, H)
        a = mm(a, p["wo"]) + p["bo"]
        y = x + a
        mu = y.mean(-1, keepdims=True)
        var = ((y - mu) ** 2).mean(-1, keepdims=True)
        y = (y - mu) / jnp.sqrt(var + 1e-5) * p["ln1_g"] + p["ln1_b"]
        f = jnp.maximum(mm(y, p["w1"]) + p["b1"], 0.0)
        f = mm(f, p["w2"]) + p["b2"]
        z = y + f
        mu2 = z.mean(-1, keepdims=True)
        var2 = ((z - mu2) ** 2).mean(-1, keepdims=True)
        x = (z - mu2) / jnp.sqrt(var2 + 1e-5) * p["ln2_g"] + p["ln2_b"]
    return x


if __name__ == "__main__":
    # Small config consistent with Encoder(input_dim, hid_dim, n_layers, n_heads, pf_dim, ...)
    INPUT_DIM, HID_DIM, N_LAYERS, N_HEADS, PF_DIM, MAX_LEN = 50, 32, 2, 4, 64, 100
    B, S = 2, 8

    key = jax.random.PRNGKey(0)
    k_tok, k_par = jax.random.split(key)
    src = jax.random.randint(k_tok, (B, S), 0, INPUT_DIM, dtype=jnp.int32)
    # Mask the last two key positions of each sequence (mask==0 -> padded).
    src_mask = jnp.ones((B, S), jnp.float32).at[:, -2:].set(0.0)

    params = init_params(k_par, INPUT_DIM, HID_DIM, N_LAYERS, N_HEADS, PF_DIM, MAX_LEN)
    packed = pack_params(params)

    out = jax.block_until_ready(encoder_forward(src, src_mask, params, packed, N_HEADS))
    ref = jax.block_until_ready(ref_encoder(src, src_mask, params, N_HEADS))

    assert out.shape == (B, S, HID_DIM)
    assert bool(jnp.allclose(out, ref, atol=2e-3, rtol=2e-3)), "mismatch vs reference"

    print("KERNEL_OK")
</pallas_src>

<mosaic_0001>
module attributes {stable_mosaic.version = 11 : i64} {
  func.func @encoder_stack_kernel(%arg0: memref<2x8x32xf32, #tpu.memory_space<vmem>>, %arg1: memref<64x64xf32, #tpu.memory_space<vmem>>, %arg2: memref<2x32x96xbf16, #tpu.memory_space<vmem>>, %arg3: memref<2x1x96xf32, #tpu.memory_space<vmem>>, %arg4: memref<2x32x32xbf16, #tpu.memory_space<vmem>>, %arg5: memref<2x32x64xbf16, #tpu.memory_space<vmem>>, %arg6: memref<2x1x64xf32, #tpu.memory_space<vmem>>, %arg7: memref<2x64x32xbf16, #tpu.memory_space<vmem>>, %arg8: memref<2x6x32xf32, #tpu.memory_space<vmem>>, %arg9: memref<2x8x32xf32, #tpu.memory_space<vmem>>) attributes {dimension_semantics = [], scalar_prefetch = 0 : i64, scratch_operands = 0 : i64, tpu.core_type = #tpu.core_type<tc>} {
    %c0 = arith.constant 0 : index
    %c0_0 = arith.constant 0 : index
    %c0_1 = arith.constant 0 : index
    %0 = vector.load %arg0[%c0, %c0_0, %c0_1] : memref<2x8x32xf32, #tpu.memory_space<vmem>>, vector<2x8x32xf32>
    %1 = vector.shape_cast %0 : vector<2x8x32xf32> to vector<16x32xf32>
    %c0_2 = arith.constant 0 : index
    %c0_3 = arith.constant 0 : index
    %2 = vector.load %arg1[%c0_2, %c0_3] : memref<64x64xf32, #tpu.memory_space<vmem>>, vector<64x64xf32>
    %c0_4 = arith.constant 0 : index
    %c0_5 = arith.constant 0 : index
    %c0_6 = arith.constant 0 : index
    %3 = vector.load %arg8[%c0_4, %c0_5, %c0_6] : memref<2x6x32xf32, #tpu.memory_space<vmem>>, vector<1x6x32xf32>
    %4 = vector.shape_cast %3 : vector<1x6x32xf32> to vector<6x32xf32>
    %5 = vector.extract_strided_slice %4 {offsets = [0, 0], sizes = [1, 32], strides = [1, 1]} : vector<6x32xf32> to vector<1x32xf32>
    %6 = vector.extract_strided_slice %4 {offsets = [1, 0], sizes = [1, 32], strides = [1, 1]} : vector<6x32xf32> to vector<1x32xf32>
    %7 = vector.extract_strided_slice %4 {offsets = [2, 0], sizes = [1, 32], strides = [1, 1]} : vector<6x32xf32> to vector<1x32xf32>
    %8 = vector.extract_strided_slice %4 {offsets = [3, 0], sizes = [1, 32], strides = [1, 1]} : vector<6x32xf32> to vector<1x32xf32>
    %9 = vector.extract_strided_slice %4 {offsets = [4, 0], sizes = [1, 32], strides = [1, 1]} : vector<6x32xf32> to vector<1x32xf32>
    %10 = vector.extract_strided_slice %4 {offsets = [5, 0], sizes = [1, 32], strides = [1, 1]} : vector<6x32xf32> to vector<1x32xf32>
    %11 = arith.truncf %1 : vector<16x32xf32> to vector<16x32xbf16>
    %c0_7 = arith.constant 0 : index
    %c0_8 = arith.constant 0 : index
    %c0_9 = arith.constant 0 : index
    %12 = vector.load %arg2[%c0_7, %c0_8, %c0_9] : memref<2x32x96xbf16, #tpu.memory_space<vmem>>, vector<1x32x96xbf16>
    %13 = vector.shape_cast %12 : vector<1x32x96xbf16> to vector<32x96xbf16>
    %cst = arith.constant dense<0.000000e+00> : vector<16x96xf32>
    %14 = tpu.matmul %11, %13, %cst {dimension_numbers = #tpu.dot_dimension_numbers<[1], [0], [0], [1], [0, 0, 1, 1], [], []>} : vector<16x32xbf16>, vector<32x96xbf16>, vector<16x96xf32> -> vector<16x96xf32>
    %c0_10 = arith.constant 0 : index
    %c0_11 = arith.constant 0 : index
    %c0_12 = arith.constant 0 : index
    %15 = vector.load %arg3[%c0_10, %c0_11, %c0_12] : memref<2x1x96xf32, #tpu.memory_space<vmem>>, vector<1x1x96xf32>
    %16 = vector.shape_cast %15 : vector<1x1x96xf32> to vector<1x96xf32>
    %17 = vector.broadcast %16 : vector<1x96xf32> to vector<16x96xf32>
    %18 = arith.addf %14, %17 : vector<16x96xf32>
    %19 = vector.extract_strided_slice %18 {offsets = [0, 0], sizes = [8, 8], strides = [1, 1]} : vector<16x96xf32> to vector<8x8xf32>
    %20 = vector.extract_strided_slice %18 {offsets = [0, 32], sizes = [8, 8], strides = [1, 1]} : vector<16x96xf32> to vector<8x8xf32>
    %21 = vector.extract_strided_slice %18 {offsets = [0, 64], sizes = [8, 8], strides = [1, 1]} : vector<16x96xf32> to vector<8x8xf32>
    %22 = vector.extract_strided_slice %18 {offsets = [0, 8], sizes = [8, 8], strides = [1, 1]} : vector<16x96xf32> to vector<8x8xf32>
    %23 = vector.extract_strided_slice %18 {offsets = [0, 40], sizes = [8, 8], strides = [1, 1]} : vector<16x96xf32> to vector<8x8xf32>
    %24 = vector.extract_strided_slice %18 {offsets = [0, 72], sizes = [8, 8], strides = [1, 1]} : vector<16x96xf32> to vector<8x8xf32>
    %25 = vector.extract_strided_slice %18 {offsets = [0, 16], sizes = [8, 8], strides = [1, 1]} : vector<16x96xf32> to vector<8x8xf32>
    %26 = vector.extract_strided_slice %18 {offsets = [0, 48], sizes = [8, 8], strides = [1, 1]} : vector<16x96xf32> to vector<8x8xf32>
    %27 = vector.extract_strided_slice %18 {offsets = [0, 80], sizes = [8, 8], strides = [1, 1]} : vector<16x96xf32> to vector<8x8xf32>
    %28 = vector.extract_strided_slice %18 {offsets = [0, 24], sizes = [8, 8], strides = [1, 1]} : vector<16x96xf32> to vector<8x8xf32>
    %29 = vector.extract_strided_slice %18 {offsets = [0, 56], sizes = [8, 8], strides = [1, 1]} : vector<16x96xf32> to vector<8x8xf32>
    %30 = vector.extract_strided_slice %18 {offsets = [0, 88], sizes = [8, 8], strides = [1, 1]} : vector<16x96xf32> to vector<8x8xf32>
    %31 = vector.extract_strided_slice %18 {offsets = [8, 0], sizes = [8, 8], strides = [1, 1]} : vector<16x96xf32> to vector<8x8xf32>
    %32 = vector.extract_strided_slice %18 {offsets = [8, 32], sizes = [8, 8], strides = [1, 1]} : vector<16x96xf32> to vector<8x8xf32>
    %33 = vector.extract_strided_slice %18 {offsets = [8, 64], sizes = [8, 8], strides = [1, 1]} : vector<16x96xf32> to vector<8x8xf32>
    %34 = vector.extract_strided_slice %18 {offsets = [8, 8], sizes = [8, 8], strides = [1, 1]} : vector<16x96xf32> to vector<8x8xf32>
    %35 = vector.extract_strided_slice %18 {offsets = [8, 40], sizes = [8, 8], strides = [1, 1]} : vector<16x96xf32> to vector<8x8xf32>
    %36 = vector.extract_strided_slice %18 {offsets = [8, 72], sizes = [8, 8], strides = [1, 1]} : vector<16x96xf32> to vector<8x8xf32>
    %37 = vector.extract_strided_slice %18 {offsets = [8, 16], sizes = [8, 8], strides = [1, 1]} : vector<16x96xf32> to vector<8x8xf32>
    %38 = vector.extract_strided_slice %18 {offsets = [8, 48], sizes = [8, 8], strides = [1, 1]} : vector<16x96xf32> to vector<8x8xf32>
    %39 = vector.extract_strided_slice %18 {offsets = [8, 80], sizes = [8, 8], strides = [1, 1]} : vector<16x96xf32> to vector<8x8xf32>
    %40 = vector.extract_strided_slice %18 {offsets = [8, 24], sizes = [8, 8], strides = [1, 1]} : vector<16x96xf32> to vector<8x8xf32>
    %41 = vector.extract_strided_slice %18 {offsets = [8, 56], sizes = [8, 8], strides = [1, 1]} : vector<16x96xf32> to vector<8x8xf32>
    %42 = vector.extract_strided_slice %18 {offsets = [8, 88], sizes = [8, 8], strides = [1, 1]} : vector<16x96xf32> to vector<8x8xf32>
    %43 = tpu.concatenate %19, %22, %25, %28, %31, %34, %37, %40 in 0 : vector<8x8xf32>, vector<8x8xf32>, vector<8x8xf32>, vector<8x8xf32>, vector<8x8xf32>, vector<8x8xf32>, vector<8x8xf32>, vector<8x8xf32> -> vector<64x8xf32>
    %cst_13 = arith.constant 0.353553385 : f32
    %44 = vector.broadcast %cst_13 : f32 to vector<64x8xf32>
    %45 = arith.mulf %43, %44 : vector<64x8xf32>
    %46 = arith.truncf %45 : vector<64x8xf32> to vector<64x8xbf16>
    %47 = tpu.concatenate %20, %23, %26, %29, %32, %35, %38, %41 in 0 : vector<8x8xf32>, vector<8x8xf32>, vector<8x8xf32>, vector<8x8xf32>, vector<8x8xf32>, vector<8x8xf32>, vector<8x8xf32>, vector<8x8xf32> -> vector<64x8xf32>
    %48 = arith.truncf %47 : vector<64x8xf32> to vector<64x8xbf16>
    %49 = tpu.concatenate %21, %24, %27, %30, %33, %36, %39, %42 in 0 : vector<8x8xf32>, vector<8x8xf32>, vector<8x8xf32>, vector<8x8xf32>, vector<8x8xf32>, vector<8x8xf32>, vector<8x8xf32>, vector<8x8xf32> -> vector<64x8xf32>
    %50 = arith.truncf %49 : vector<64x8xf32> to vector<64x8xbf16>
    %cst_14 = arith.constant dense<0.000000e+00> : vector<64x64xf32>
    %51 = tpu.matmul %46, %48, %cst_14 {dimension_numbers = #tpu.dot_dimension_numbers<[1], [1], [0], [0], [0, 0, 1, 0], [], []>} : vector<64x8xbf16>, vector<64x8xbf16>, vector<64x64xf32> -> vector<64x64xf32>
    %52 = arith.addf %51, %2 : vector<64x64xf32>
    %cst_15 = arith.constant dense<0xFF800000> : vector<64xf32>
    %53 = vector.multi_reduction <maximumf>, %52, %cst_15 [1] : vector<64x64xf32> to vector<64xf32>
    %54 = vector.shape_cast %53 : vector<64xf32> to vector<64x1xf32>
    %55 = vector.broadcast %54 : vector<64x1xf32> to vector<64x64xf32>
    %56 = arith.subf %52, %55 : vector<64x64xf32>
    %57 = math.exp %56 : vector<64x64xf32>
    %cst_16 = arith.constant dense<0.000000e+00> : vector<64xf32>
    %58 = vector.multi_reduction <add>, %57, %cst_16 [1] : vector<64x64xf32> to vector<64xf32>
    %59 = vector.shape_cast %58 : vector<64xf32> to vector<64x1xf32>
    %60 = vector.broadcast %59 : vector<64x1xf32> to vector<64x64xf32>
    %61 = arith.divf %57, %60 : vector<64x64xf32>
    %62 = arith.truncf %61 : vector<64x64xf32> to vector<64x64xbf16>
    %cst_17 = arith.constant dense<0.000000e+00> : vector<64x8xf32>
    %63 = tpu.matmul %62, %50, %cst_17 {dimension_numbers = #tpu.dot_dimension_numbers<[1], [0], [0], [1], [0, 0, 1, 1], [], []>} : vector<64x64xbf16>, vector<64x8xbf16>, vector<64x8xf32> -> vector<64x8xf32>
    %64 = vector.extract_strided_slice %63 {offsets = [0, 0], sizes = [8, 8], strides = [1, 1]} : vector<64x8xf32> to vector<8x8xf32>
    %65 = vector.extract_strided_slice %63 {offsets = [8, 0], sizes = [8, 8], strides = [1, 1]} : vector<64x8xf32> to vector<8x8xf32>
    %66 = vector.extract_strided_slice %63 {offsets = [16, 0], sizes = [8, 8], strides = [1, 1]} : vector<64x8xf32> to vector<8x8xf32>
    %67 = vector.extract_strided_slice %63 {offsets = [24, 0], sizes = [8, 8], strides = [1, 1]} : vector<64x8xf32> to vector<8x8xf32>
    %68 = tpu.concatenate %64, %65, %66, %67 in 1 : vector<8x8xf32>, vector<8x8xf32>, vector<8x8xf32>, vector<8x8xf32> -> vector<8x32xf32>
    %69 = vector.extract_strided_slice %63 {offsets = [32, 0], sizes = [8, 8], strides = [1, 1]} : vector<64x8xf32> to vector<8x8xf32>
    %70 = vector.extract_strided_slice %63 {offsets = [40, 0], sizes = [8, 8], strides = [1, 1]} : vector<64x8xf32> to vector<8x8xf32>
    %71 = vector.extract_strided_slice %63 {offsets = [48, 0], sizes = [8, 8], strides = [1, 1]} : vector<64x8xf32> to vector<8x8xf32>
    %72 = vector.extract_strided_slice %63 {offsets = [56, 0], sizes = [8, 8], strides = [1, 1]} : vector<64x8xf32> to vector<8x8xf32>
    %73 = tpu.concatenate %69, %70, %71, %72 in 1 : vector<8x8xf32>, vector<8x8xf32>, vector<8x8xf32>, vector<8x8xf32> -> vector<8x32xf32>
    %74 = tpu.concatenate %68, %73 in 0 : vector<8x32xf32>, vector<8x32xf32> -> vector<16x32xf32>
    %75 = arith.truncf %74 : vector<16x32xf32> to vector<16x32xbf16>
    %c0_18 = arith.constant 0 : index
    %c0_19 = arith.constant 0 : index
    %c0_20 = arith.constant 0 : index
    %76 = vector.load %arg4[%c0_18, %c0_19, %c0_20] : memref<2x32x32xbf16, #tpu.memory_space<vmem>>, vector<1x32x32xbf16>
    %77 = vector.shape_cast %76 : vector<1x32x32xbf16> to vector<32x32xbf16>
    %cst_21 = arith.constant dense<0.000000e+00> : vector<16x32xf32>
    %78 = tpu.matmul %75, %77, %cst_21 {dimension_numbers = #tpu.dot_dimension_numbers<[1], [0], [0], [1], [0, 0, 1, 1], [], []>} : vector<16x32xbf16>, vector<32x32xbf16>, vector<16x32xf32> -> vector<16x32xf32>
    %79 = vector.broadcast %5 : vector<1x32xf32> to vector<16x32xf32>
    %80 = arith.addf %78, %79 : vector<16x32xf32>
    %81 = arith.addf %1, %80 : vector<16x32xf32>
    %cst_22 = arith.constant dense<0.000000e+00> : vector<16xf32>
    %82 = vector.multi_reduction <add>, %81, %cst_22 [1] : vector<16x32xf32> to vector<16xf32>
    %83 = vector.shape_cast %82 : vector<16xf32> to vector<16x1xf32>
    %cst_23 = arith.constant 3.200000e+01 : f32
    %84 = vector.broadcast %cst_23 : f32 to vector<16x1xf32>
    %85 = arith.divf %83, %84 : vector<16x1xf32>
    %86 = vector.broadcast %85 : vector<16x1xf32> to vector<16x32xf32>
    %87 = arith.subf %81, %86 : vector<16x32xf32>
    %88 = arith.mulf %87, %87 : vector<16x32xf32>
    %cst_24 = arith.constant dense<0.000000e+00> : vector<16xf32>
    %89 = vector.multi_reduction <add>, %88, %cst_24 [1] : vector<16x32xf32> to vector<16xf32>
    %90 = vector.shape_cast %89 : vector<16xf32> to vector<16x1xf32>
    %cst_25 = arith.constant 3.200000e+01 : f32
    %91 = vector.broadcast %cst_25 : f32 to vector<16x1xf32>
    %92 = arith.divf %90, %91 : vector<16x1xf32>
    %93 = vector.broadcast %85 : vector<16x1xf32> to vector<16x32xf32>
    %94 = arith.subf %81, %93 : vector<16x32xf32>
    %cst_26 = arith.constant 9.99999974E-6 : f32
    %95 = vector.broadcast %cst_26 : f32 to vector<16x1xf32>
    %96 = arith.addf %92, %95 : vector<16x1xf32>
    %97 = math.rsqrt %96 : vector<16x1xf32>
    %98 = vector.broadcast %97 : vector<16x1xf32> to vector<16x32xf32>
    %99 = arith.mulf %94, %98 : vector<16x32xf32>
    %100 = vector.broadcast %6 : vector<1x32xf32> to vector<16x32xf32>
    %101 = arith.mulf %99, %100 : vector<16x32xf32>
    %102 = vector.broadcast %7 : vector<1x32xf32> to vector<16x32xf32>
    %103 = arith.addf %101, %102 : vector<16x32xf32>
    %104 = arith.truncf %103 : vector<16x32xf32> to vector<16x32xbf16>
    %c0_27 = arith.constant 0 : index
    %c0_28 = arith.constant 0 : index
    %c0_29 = arith.constant 0 : index
    %105 = vector.load %arg5[%c0_27, %c0_28, %c0_29] : memref<2x32x64xbf16, #tpu.memory_space<vmem>>, vector<1x32x64xbf16>
    %106 = vector.shape_cast %105 : vector<1x32x64xbf16> to vector<32x64xbf16>
    %cst_30 = arith.constant dense<0.000000e+00> : vector<16x64xf32>
    %107 = tpu.matmul %104, %106, %cst_30 {dimension_numbers = #tpu.dot_dimension_numbers<[1], [0], [0], [1], [0, 0, 1, 1], [], []>} : vector<16x32xbf16>, vector<32x64xbf16>, vector<16x64xf32> -> vector<16x64xf32>
    %c0_31 = arith.constant 0 : index
    %c0_32 = arith.constant 0 : index
    %c0_33 = arith.constant 0 : index
    %108 = vector.load %arg6[%c0_31, %c0_32, %c0_33] : memref<2x1x64xf32, #tpu.memory_space<vmem>>, vector<1x1x64xf32>
    %109 = vector.shape_cast %108 : vector<1x1x64xf32> to vector<1x64xf32>
    %110 = vector.broadcast %109 : vector<1x64xf32> to vector<16x64xf32>
    %111 = arith.addf %107, %110 : vector<16x64xf32>
    %cst_34 = arith.constant 0.000000e+00 : f32
    %112 = vector.broadcast %cst_34 : f32 to vector<16x64xf32>
    %113 = arith.maximumf %111, %112 : vector<16x64xf32>
    %114 = arith.truncf %113 : vector<16x64xf32> to vector<16x64xbf16>
    %c0_35 = arith.constant 0 : index
    %c0_36 = arith.constant 0 : index
    %c0_37 = arith.constant 0 : index
    %115 = vector.load %arg7[%c0_35, %c0_36, %c0_37] : memref<2x64x32xbf16, #tpu.memory_space<vmem>>, vector<1x64x32xbf16>
    %116 = vector.shape_cast %115 : vector<1x64x32xbf16> to vector<64x32xbf16>
    %cst_38 = arith.constant dense<0.000000e+00> : vector<16x32xf32>
    %117 = tpu.matmul %114, %116, %cst_38 {dimension_numbers = #tpu.dot_dimension_numbers<[1], [0], [0], [1], [0, 0, 1, 1], [], []>} : vector<16x64xbf16>, vector<64x32xbf16>, vector<16x32xf32> -> vector<16x32xf32>
    %118 = vector.broadcast %8 : vector<1x32xf32> to vector<16x32xf32>
    %119 = arith.addf %117, %118 : vector<16x32xf32>
    %120 = arith.addf %103, %119 : vector<16x32xf32>
    %cst_39 = arith.constant dense<0.000000e+00> : vector<16xf32>
    %121 = vector.multi_reduction <add>, %120, %cst_39 [1] : vector<16x32xf32> to vector<16xf32>
    %122 = vector.shape_cast %121 : vector<16xf32> to vector<16x1xf32>
    %cst_40 = arith.constant 3.200000e+01 : f32
    %123 = vector.broadcast %cst_40 : f32 to vector<16x1xf32>
    %124 = arith.divf %122, %123 : vector<16x1xf32>
    %125 = vector.broadcast %124 : vector<16x1xf32> to vector<16x32xf32>
    %126 = arith.subf %120, %125 : vector<16x32xf32>
    %127 = arith.mulf %126, %126 : vector<16x32xf32>
    %cst_41 = arith.constant dense<0.000000e+00> : vector<16xf32>
    %128 = vector.multi_reduction <add>, %127, %cst_41 [1] : vector<16x32xf32> to vector<16xf32>
    %129 = vector.shape_cast %128 : vector<16xf32> to vector<16x1xf32>
    %cst_42 = arith.constant 3.200000e+01 : f32
    %130 = vector.broadcast %cst_42 : f32 to vector<16x1xf32>
    %131 = arith.divf %129, %130 : vector<16x1xf32>
    %132 = vector.broadcast %124 : vector<16x1xf32> to vector<16x32xf32>
    %133 = arith.subf %120, %132 : vector<16x32xf32>
    %cst_43 = arith.constant 9.99999974E-6 : f32
    %134 = vector.broadcast %cst_43 : f32 to vector<16x1xf32>
    %135 = arith.addf %131, %134 : vector<16x1xf32>
    %136 = math.rsqrt %135 : vector<16x1xf32>
    %137 = vector.broadcast %136 : vector<16x1xf32> to vector<16x32xf32>
    %138 = arith.mulf %133, %137 : vector<16x32xf32>
    %139 = vector.broadcast %9 : vector<1x32xf32> to vector<16x32xf32>
    %140 = arith.mulf %138, %139 : vector<16x32xf32>
    %141 = vector.broadcast %10 : vector<1x32xf32> to vector<16x32xf32>
    %142 = arith.addf %140, %141 : vector<16x32xf32>
    %c1 = arith.constant 1 : index
    %c0_44 = arith.constant 0 : index
    %c0_45 = arith.constant 0 : index
    %143 = vector.load %arg8[%c1, %c0_44, %c0_45] : memref<2x6x32xf32, #tpu.memory_space<vmem>>, vector<1x6x32xf32>
    %144 = vector.shape_cast %143 : vector<1x6x32xf32> to vector<6x32xf32>
    %145 = vector.extract_strided_slice %144 {offsets = [0, 0], sizes = [1, 32], strides = [1, 1]} : vector<6x32xf32> to vector<1x32xf32>
    %146 = vector.extract_strided_slice %144 {offsets = [1, 0], sizes = [1, 32], strides = [1, 1]} : vector<6x32xf32> to vector<1x32xf32>
    %147 = vector.extract_strided_slice %144 {offsets = [2, 0], sizes = [1, 32], strides = [1, 1]} : vector<6x32xf32> to vector<1x32xf32>
    %148 = vector.extract_strided_slice %144 {offsets = [3, 0], sizes = [1, 32], strides = [1, 1]} : vector<6x32xf32> to vector<1x32xf32>
    %149 = vector.extract_strided_slice %144 {offsets = [4, 0], sizes = [1, 32], strides = [1, 1]} : vector<6x32xf32> to vector<1x32xf32>
    %150 = vector.extract_strided_slice %144 {offsets = [5, 0], sizes = [1, 32], strides = [1, 1]} : vector<6x32xf32> to vector<1x32xf32>
    %151 = arith.truncf %142 : vector<16x32xf32> to vector<16x32xbf16>
    %c1_46 = arith.constant 1 : index
    %c0_47 = arith.constant 0 : index
    %c0_48 = arith.constant 0 : index
    %152 = vector.load %arg2[%c1_46, %c0_47, %c0_48] : memref<2x32x96xbf16, #tpu.memory_space<vmem>>, vector<1x32x96xbf16>
    %153 = vector.shape_cast %152 : vector<1x32x96xbf16> to vector<32x96xbf16>
    %cst_49 = arith.constant dense<0.000000e+00> : vector<16x96xf32>
    %154 = tpu.matmul %151, %153, %cst_49 {dimension_numbers = #tpu.dot_dimension_numbers<[1], [0], [0], [1], [0, 0, 1, 1], [], []>} : vector<16x32xbf16>, vector<32x96xbf16>, vector<16x96xf32> -> vector<16x96xf32>
    %c1_50 = arith.constant 1 : index
    %c0_51 = arith.constant 0 : index
    %c0_52 = arith.constant 0 : index
    %155 = vector.load %arg3[%c1_50, %c0_51, %c0_52] : memref<2x1x96xf32, #tpu.memory_space<vmem>>, vector<1x1x96xf32>
    %156 = vector.shape_cast %155 : vector<1x1x96xf32> to vector<1x96xf32>
    %157 = vector.broadcast %156 : vector<1x96xf32> to vector<16x96xf32>
    %158 = arith.addf %154, %157 : vector<16x96xf32>
    %159 = vector.extract_strided_slice %158 {offsets = [0, 0], sizes = [8, 8], strides = [1, 1]} : vector<16x96xf32> to vector<8x8xf32>
    %160 = vector.extract_strided_slice %158 {offsets = [0, 32], sizes = [8, 8], strides = [1, 1]} : vector<16x96xf32> to vector<8x8xf32>
    %161 = vector.extract_strided_slice %158 {offsets = [0, 64], sizes = [8, 8], strides = [1, 1]} : vector<16x96xf32> to vector<8x8xf32>
    %162 = vector.extract_strided_slice %158 {offsets = [0, 8], sizes = [8, 8], strides = [1, 1]} : vector<16x96xf32> to vector<8x8xf32>
    %163 = vector.extract_strided_slice %158 {offsets = [0, 40], sizes = [8, 8], strides = [1, 1]} : vector<16x96xf32> to vector<8x8xf32>
    %164 = vector.extract_strided_slice %158 {offsets = [0, 72], sizes = [8, 8], strides = [1, 1]} : vector<16x96xf32> to vector<8x8xf32>
    %165 = vector.extract_strided_slice %158 {offsets = [0, 16], sizes = [8, 8], strides = [1, 1]} : vector<16x96xf32> to vector<8x8xf32>
    %166 = vector.extract_strided_slice %158 {offsets = [0, 48], sizes = [8, 8], strides = [1, 1]} : vector<16x96xf32> to vector<8x8xf32>
    %167 = vector.extract_strided_slice %158 {offsets = [0, 80], sizes = [8, 8], strides = [1, 1]} : vector<16x96xf32> to vector<8x8xf32>
    %168 = vector.extract_strided_slice %158 {offsets = [0, 24], sizes = [8, 8], strides = [1, 1]} : vector<16x96xf32> to vector<8x8xf32>
    %169 = vector.extract_strided_slice %158 {offsets = [0, 56], sizes = [8, 8], strides = [1, 1]} : vector<16x96xf32> to vector<8x8xf32>
    %170 = vector.extract_strided_slice %158 {offsets = [0, 88], sizes = [8, 8], strides = [1, 1]} : vector<16x96xf32> to vector<8x8xf32>
    %171 = vector.extract_strided_slice %158 {offsets = [8, 0], sizes = [8, 8], strides = [1, 1]} : vector<16x96xf32> to vector<8x8xf32>
    %172 = vector.extract_strided_slice %158 {offsets = [8, 32], sizes = [8, 8], strides = [1, 1]} : vector<16x96xf32> to vector<8x8xf32>
    %173 = vector.extract_strided_slice %158 {offsets = [8, 64], sizes = [8, 8], strides = [1, 1]} : vector<16x96xf32> to vector<8x8xf32>
    %174 = vector.extract_strided_slice %158 {offsets = [8, 8], sizes = [8, 8], strides = [1, 1]} : vector<16x96xf32> to vector<8x8xf32>
    %175 = vector.extract_strided_slice %158 {offsets = [8, 40], sizes = [8, 8], strides = [1, 1]} : vector<16x96xf32> to vector<8x8xf32>
    %176 = vector.extract_strided_slice %158 {offsets = [8, 72], sizes = [8, 8], strides = [1, 1]} : vector<16x96xf32> to vector<8x8xf32>
    %177 = vector.extract_strided_slice %158 {offsets = [8, 16], sizes = [8, 8], strides = [1, 1]} : vector<16x96xf32> to vector<8x8xf32>
    %178 = vector.extract_strided_slice %158 {offsets = [8, 48], sizes = [8, 8], strides = [1, 1]} : vector<16x96xf32> to vector<8x8xf32>
    %179 = vector.extract_strided_slice %158 {offsets = [8, 80], sizes = [8, 8], strides = [1, 1]} : vector<16x96xf32> to vector<8x8xf32>
    %180 = vector.extract_strided_slice %158 {offsets = [8, 24], sizes = [8, 8], strides = [1, 1]} : vector<16x96xf32> to vector<8x8xf32>
    %181 = vector.extract_strided_slice %158 {offsets = [8, 56], sizes = [8, 8], strides = [1, 1]} : vector<16x96xf32> to vector<8x8xf32>
    %182 = vector.extract_strided_slice %158 {offsets = [8, 88], sizes = [8, 8], strides = [1, 1]} : vector<16x96xf32> to vector<8x8xf32>
    %183 = tpu.concatenate %159, %162, %165, %168, %171, %174, %177, %180 in 0 : vector<8x8xf32>, vector<8x8xf32>, vector<8x8xf32>, vector<8x8xf32>, vector<8x8xf32>, vector<8x8xf32>, vector<8x8xf32>, vector<8x8xf32> -> vector<64x8xf32>
    %cst_53 = arith.constant 0.353553385 : f32
    %184 = vector.broadcast %cst_53 : f32 to vector<64x8xf32>
    %185 = arith.mulf %183, %184 : vector<64x8xf32>
    %186 = arith.truncf %185 : vector<64x8xf32> to vector<64x8xbf16>
    %187 = tpu.concatenate %160, %163, %166, %169, %172, %175, %178, %181 in 0 : vector<8x8xf32>, vector<8x8xf32>, vector<8x8xf32>, vector<8x8xf32>, vector<8x8xf32>, vector<8x8xf32>, vector<8x8xf32>, vector<8x8xf32> -> vector<64x8xf32>
    %188 = arith.truncf %187 : vector<64x8xf32> to vector<64x8xbf16>
    %189 = tpu.concatenate %161, %164, %167, %170, %173, %176, %179, %182 in 0 : vector<8x8xf32>, vector<8x8xf32>, vector<8x8xf32>, vector<8x8xf32>, vector<8x8xf32>, vector<8x8xf32>, vector<8x8xf32>, vector<8x8xf32> -> vector<64x8xf32>
    %190 = arith.truncf %189 : vector<64x8xf32> to vector<64x8xbf16>
    %cst_54 = arith.constant dense<0.000000e+00> : vector<64x64xf32>
    %191 = tpu.matmul %186, %188, %cst_54 {dimension_numbers = #tpu.dot_dimension_numbers<[1], [1], [0], [0], [0, 0, 1, 0], [], []>} : vector<64x8xbf16>, vector<64x8xbf16>, vector<64x64xf32> -> vector<64x64xf32>
    %192 = arith.addf %191, %2 : vector<64x64xf32>
    %cst_55 = arith.constant dense<0xFF800000> : vector<64xf32>
    %193 = vector.multi_reduction <maximumf>, %192, %cst_55 [1] : vector<64x64xf32> to vector<64xf32>
    %194 = vector.shape_cast %193 : vector<64xf32> to vector<64x1xf32>
    %195 = vector.broadcast %194 : vector<64x1xf32> to vector<64x64xf32>
    %196 = arith.subf %192, %195 : vector<64x64xf32>
    %197 = math.exp %196 : vector<64x64xf32>
    %cst_56 = arith.constant dense<0.000000e+00> : vector<64xf32>
    %198 = vector.multi_reduction <add>, %197, %cst_56 [1] : vector<64x64xf32> to vector<64xf32>
    %199 = vector.shape_cast %198 : vector<64xf32> to vector<64x1xf32>
    %200 = vector.broadcast %199 : vector<64x1xf32> to vector<64x64xf32>
    %201 = arith.divf %197, %200 : vector<64x64xf32>
    %202 = arith.truncf %201 : vector<64x64xf32> to vector<64x64xbf16>
    %cst_57 = arith.constant dense<0.000000e+00> : vector<64x8xf32>
    %203 = tpu.matmul %202, %190, %cst_57 {dimension_numbers = #tpu.dot_dimension_numbers<[1], [0], [0], [1], [0, 0, 1, 1], [], []>} : vector<64x64xbf16>, vector<64x8xbf16>, vector<64x8xf32> -> vector<64x8xf32>
    %204 = vector.extract_strided_slice %203 {offsets = [0, 0], sizes = [8, 8], strides = [1, 1]} : vector<64x8xf32> to vector<8x8xf32>
    %205 = vector.extract_strided_slice %203 {offsets = [8, 0], sizes = [8, 8], strides = [1, 1]} : vector<64x8xf32> to vector<8x8xf32>
    %206 = vector.extract_strided_slice %203 {offsets = [16, 0], sizes = [8, 8], strides = [1, 1]} : vector<64x8xf32> to vector<8x8xf32>
    %207 = vector.extract_strided_slice %203 {offsets = [24, 0], sizes = [8, 8], strides = [1, 1]} : vector<64x8xf32> to vector<8x8xf32>
    %208 = tpu.concatenate %204, %205, %206, %207 in 1 : vector<8x8xf32>, vector<8x8xf32>, vector<8x8xf32>, vector<8x8xf32> -> vector<8x32xf32>
    %209 = vector.extract_strided_slice %203 {offsets = [32, 0], sizes = [8, 8], strides = [1, 1]} : vector<64x8xf32> to vector<8x8xf32>
    %210 = vector.extract_strided_slice %203 {offsets = [40, 0], sizes = [8, 8], strides = [1, 1]} : vector<64x8xf32> to vector<8x8xf32>
    %211 = vector.extract_strided_slice %203 {offsets = [48, 0], sizes = [8, 8], strides = [1, 1]} : vector<64x8xf32> to vector<8x8xf32>
    %212 = vector.extract_strided_slice %203 {offsets = [56, 0], sizes = [8, 8], strides = [1, 1]} : vector<64x8xf32> to vector<8x8xf32>
    %213 = tpu.concatenate %209, %210, %211, %212 in 1 : vector<8x8xf32>, vector<8x8xf32>, vector<8x8xf32>, vector<8x8xf32> -> vector<8x32xf32>
    %214 = tpu.concatenate %208, %213 in 0 : vector<8x32xf32>, vector<8x32xf32> -> vector<16x32xf32>
    %215 = arith.truncf %214 : vector<16x32xf32> to vector<16x32xbf16>
    %c1_58 = arith.constant 1 : index
    %c0_59 = arith.constant 0 : index
    %c0_60 = arith.constant 0 : index
    %216 = vector.load %arg4[%c1_58, %c0_59, %c0_60] : memref<2x32x32xbf16, #tpu.memory_space<vmem>>, vector<1x32x32xbf16>
    %217 = vector.shape_cast %216 : vector<1x32x32xbf16> to vector<32x32xbf16>
    %cst_61 = arith.constant dense<0.000000e+00> : vector<16x32xf32>
    %218 = tpu.matmul %215, %217, %cst_61 {dimension_numbers = #tpu.dot_dimension_numbers<[1], [0], [0], [1], [0, 0, 1, 1], [], []>} : vector<16x32xbf16>, vector<32x32xbf16>, vector<16x32xf32> -> vector<16x32xf32>
    %219 = vector.broadcast %145 : vector<1x32xf32> to vector<16x32xf32>
    %220 = arith.addf %218, %219 : vector<16x32xf32>
    %221 = arith.addf %142, %220 : vector<16x32xf32>
    %cst_62 = arith.constant dense<0.000000e+00> : vector<16xf32>
    %222 = vector.multi_reduction <add>, %221, %cst_62 [1] : vector<16x32xf32> to vector<16xf32>
    %223 = vector.shape_cast %222 : vector<16xf32> to vector<16x1xf32>
    %cst_63 = arith.constant 3.200000e+01 : f32
    %224 = vector.broadcast %cst_63 : f32 to vector<16x1xf32>
    %225 = arith.divf %223, %224 : vector<16x1xf32>
    %226 = vector.broadcast %225 : vector<16x1xf32> to vector<16x32xf32>
    %227 = arith.subf %221, %226 : vector<16x32xf32>
    %228 = arith.mulf %227, %227 : vector<16x32xf32>
    %cst_64 = arith.constant dense<0.000000e+00> : vector<16xf32>
    %229 = vector.multi_reduction <add>, %228, %cst_64 [1] : vector<16x32xf32> to vector<16xf32>
    %230 = vector.shape_cast %229 : vector<16xf32> to vector<16x1xf32>
    %cst_65 = arith.constant 3.200000e+01 : f32
    %231 = vector.broadcast %cst_65 : f32 to vector<16x1xf32>
    %232 = arith.divf %230, %231 : vector<16x1xf32>
    %233 = vector.broadcast %225 : vector<16x1xf32> to vector<16x32xf32>
    %234 = arith.subf %221, %233 : vector<16x32xf32>
    %cst_66 = arith.constant 9.99999974E-6 : f32
    %235 = vector.broadcast %cst_66 : f32 to vector<16x1xf32>
    %236 = arith.addf %232, %235 : vector<16x1xf32>
    %237 = math.rsqrt %236 : vector<16x1xf32>
    %238 = vector.broadcast %237 : vector<16x1xf32> to vector<16x32xf32>
    %239 = arith.mulf %234, %238 : vector<16x32xf32>
    %240 = vector.broadcast %146 : vector<1x32xf32> to vector<16x32xf32>
    %241 = arith.mulf %239, %240 : vector<16x32xf32>
    %242 = vector.broadcast %147 : vector<1x32xf32> to vector<16x32xf32>
    %243 = arith.addf %241, %242 : vector<16x32xf32>
    %244 = arith.truncf %243 : vector<16x32xf32> to vector<16x32xbf16>
    %c1_67 = arith.constant 1 : index
    %c0_68 = arith.constant 0 : index
    %c0_69 = arith.constant 0 : index
    %245 = vector.load %arg5[%c1_67, %c0_68, %c0_69] : memref<2x32x64xbf16, #tpu.memory_space<vmem>>, vector<1x32x64xbf16>
    %246 = vector.shape_cast %245 : vector<1x32x64xbf16> to vector<32x64xbf16>
    %cst_70 = arith.constant dense<0.000000e+00> : vector<16x64xf32>
    %247 = tpu.matmul %244, %246, %cst_70 {dimension_numbers = #tpu.dot_dimension_numbers<[1], [0], [0], [1], [0, 0, 1, 1], [], []>} : vector<16x32xbf16>, vector<32x64xbf16>, vector<16x64xf32> -> vector<16x64xf32>
    %c1_71 = arith.constant 1 : index
    %c0_72 = arith.constant 0 : index
    %c0_73 = arith.constant 0 : index
    %248 = vector.load %arg6[%c1_71, %c0_72, %c0_73] : memref<2x1x64xf32, #tpu.memory_space<vmem>>, vector<1x1x64xf32>
    %249 = vector.shape_cast %248 : vector<1x1x64xf32> to vector<1x64xf32>
    %250 = vector.broadcast %249 : vector<1x64xf32> to vector<16x64xf32>
    %251 = arith.addf %247, %250 : vector<16x64xf32>
    %cst_74 = arith.constant 0.000000e+00 : f32
    %252 = vector.broadcast %cst_74 : f32 to vector<16x64xf32>
    %253 = arith.maximumf %251, %252 : vector<16x64xf32>
    %254 = arith.truncf %253 : vector<16x64xf32> to vector<16x64xbf16>
    %c1_75 = arith.constant 1 : index
    %c0_76 = arith.constant 0 : index
    %c0_77 = arith.constant 0 : index
    %255 = vector.load %arg7[%c1_75, %c0_76, %c0_77] : memref<2x64x32xbf16, #tpu.memory_space<vmem>>, vector<1x64x32xbf16>
    %256 = vector.shape_cast %255 : vector<1x64x32xbf16> to vector<64x32xbf16>
    %cst_78 = arith.constant dense<0.000000e+00> : vector<16x32xf32>
    %257 = tpu.matmul %254, %256, %cst_78 {dimension_numbers = #tpu.dot_dimension_numbers<[1], [0], [0], [1], [0, 0, 1, 1], [], []>} : vector<16x64xbf16>, vector<64x32xbf16>, vector<16x32xf32> -> vector<16x32xf32>
    %258 = vector.broadcast %148 : vector<1x32xf32> to vector<16x32xf32>
    %259 = arith.addf %257, %258 : vector<16x32xf32>
    %260 = arith.addf %243, %259 : vector<16x32xf32>
    %cst_79 = arith.constant dense<0.000000e+00> : vector<16xf32>
    %261 = vector.multi_reduction <add>, %260, %cst_79 [1] : vector<16x32xf32> to vector<16xf32>
    %262 = vector.shape_cast %261 : vector<16xf32> to vector<16x1xf32>
    %cst_80 = arith.constant 3.200000e+01 : f32
    %263 = vector.broadcast %cst_80 : f32 to vector<16x1xf32>
    %264 = arith.divf %262, %263 : vector<16x1xf32>
    %265 = vector.broadcast %264 : vector<16x1xf32> to vector<16x32xf32>
    %266 = arith.subf %260, %265 : vector<16x32xf32>
    %267 = arith.mulf %266, %266 : vector<16x32xf32>
    %cst_81 = arith.constant dense<0.000000e+00> : vector<16xf32>
    %268 = vector.multi_reduction <add>, %267, %cst_81 [1] : vector<16x32xf32> to vector<16xf32>
    %269 = vector.shape_cast %268 : vector<16xf32> to vector<16x1xf32>
    %cst_82 = arith.constant 3.200000e+01 : f32
    %270 = vector.broadcast %cst_82 : f32 to vector<16x1xf32>
    %271 = arith.divf %269, %270 : vector<16x1xf32>
    %272 = vector.broadcast %264 : vector<16x1xf32> to vector<16x32xf32>
    %273 = arith.subf %260, %272 : vector<16x32xf32>
    %cst_83 = arith.constant 9.99999974E-6 : f32
    %274 = vector.broadcast %cst_83 : f32 to vector<16x1xf32>
    %275 = arith.addf %271, %274 : vector<16x1xf32>
    %276 = math.rsqrt %275 : vector<16x1xf32>
    %277 = vector.broadcast %276 : vector<16x1xf32> to vector<16x32xf32>
    %278 = arith.mulf %273, %277 : vector<16x32xf32>
    %279 = vector.broadcast %149 : vector<1x32xf32> to vector<16x32xf32>
    %280 = arith.mulf %278, %279 : vector<16x32xf32>
    %281 = vector.broadcast %150 : vector<1x32xf32> to vector<16x32xf32>
    %282 = arith.addf %280, %281 : vector<16x32xf32>
    %283 = vector.shape_cast %282 : vector<16x32xf32> to vector<2x8x32xf32>
    %c0_84 = arith.constant 0 : index
    %c0_85 = arith.constant 0 : index
    %c0_86 = arith.constant 0 : index
    %284 = vector.load %arg9[%c0_84, %c0_85, %c0_86] : memref<2x8x32xf32, #tpu.memory_space<vmem>>, vector<2x8x32xf32>
    tpu.vector_store %arg9[%c0_84, %c0_85, %c0_86], %283 {strides = array<i32>} : memref<2x8x32xf32, #tpu.memory_space<vmem>>, vector<2x8x32xf32>,
    return
  }
}

</mosaic_0001>

<llo_original>
// kernel: tpu_custom_call.1
$region0: #{tpu_custom_call.1}
  #allocation0 [shape = 'u32[]', space=smem, size = 0x4, offset = 0x4, fixed_abs, tag = 'smem constant byte address 0x4 - core index']
  #allocation1 [shape = 'u32[72,128]{1,0:T(1,128)}', space=vmem, size = 0x9000, scoped, tag = 'internal scratch']
  %s0 = inlined_call_operand.hbm [shape: f32[2,8,32], index: 0, kind: input, shape index: {}]
  %s1 = inlined_call_operand.vmem [shape: f32[64,64], index: 1, kind: input, shape index: {}]
  %s2 = inlined_call_operand.vmem [shape: bf16[2,32,96], index: 2, kind: input, shape index: {}]
  %s3 = inlined_call_operand.vmem [shape: f32[2,1,96], index: 3, kind: input, shape index: {}]
  %s4 = inlined_call_operand.hbm [shape: bf16[2,32,32], index: 4, kind: input, shape index: {}]
  %s5 = inlined_call_operand.hbm [shape: bf16[2,32,64], index: 5, kind: input, shape index: {}]
  %s6 = inlined_call_operand.hbm [shape: f32[2,1,64], index: 6, kind: input, shape index: {}]
  %s7 = inlined_call_operand.vmem [shape: bf16[2,64,32], index: 7, kind: input, shape index: {}]
  %s8 = inlined_call_operand.vmem [shape: f32[2,6,32], index: 8, kind: input, shape index: {}]
  %s9 = inlined_call_operand.hbm [shape: f32[2,8,32], index: 9, kind: output, shape index: {}]
  %s10 = sld [smem:[#allocation0]]
  $region62: #{tpu_custom_call.1} parent=0
    _
  %s12 = ssub.s32 1, %s10
  %s13 = scalar_select 0, %s12, %s10
  $region1: #{tpu_custom_call.1} parent=0
    #allocation2 [shape = 'u8[8192]{0}', space=vmem, size = 0x2000, scoped, tag = 'input window, operand 0, single buffered']
    #allocation3 [shape = 's32[1]{0}', space=sflag, size = 0x4, scoped, tag = 'scoped memory for tpu_custom_call.1']
    #allocation4 [shape = 's32[1]{0}', space=sflag, size = 0x4, scoped, tag = 'scoped memory for tpu_custom_call.1']
    #allocation5 [shape = 'u8[16384]{0}', space=vmem, size = 0x4000, scoped, tag = 'input window, operand 4, single buffered']
    #allocation6 [shape = 's32[1]{0}', space=sflag, size = 0x4, scoped, tag = 'scoped memory for tpu_custom_call.1']
    #allocation7 [shape = 'u8[16384]{0}', space=vmem, size = 0x4000, scoped, tag = 'input window, operand 5, single buffered']
    #allocation8 [shape = 'u8[1024]{0}', space=vmem, size = 0x400, scoped, tag = 'input window, operand 6, single buffered']
    #allocation9 [shape = 's32[1]{0}', space=sflag, size = 0x4, scoped, tag = 'scoped memory for tpu_custom_call.1']
    #allocation10 [shape = 'u8[8192]{0}', space=vmem, size = 0x2000, scoped, tag = 'output window, operand 0, single buffered']
    %14 = vsyncpa [#allocation3], 0
    %15 = vsyncpa [#allocation6], 0
    %16 = vsyncpa [#allocation9], 0
    %17 = vsyncpa [#allocation4], 0
    // Predicated region
    $region2: #{tpu_custom_call.1} parent=1 // pred_check
      _
    $region3: #{tpu_custom_call.1} parent=1 // pred_check_branch
      %19 = sbr.rel (0) target = $region5
    $region4: #{tpu_custom_call.1} parent=1 // pred_region
      %21 = vsyncadd [#allocation3], 0
      %s22 = sshll.u32 %s0, 4
      %s23 = int_to_ptr.hbm [resolvable:$true] %s22
      %s24 = sshll.u32 [#allocation2], 4
      %s25 = int_to_ptr.vmem [resolvable:$true] %s24
      %30 = dma.hbm_to_vmem [thread:$0]  %s23, 256, %s25, [#allocation3], 128, 128, 8
    $region5: #{tpu_custom_call.1} parent=1 // pred_fallthru
      _
    // Predicated region
    $region6: #{tpu_custom_call.1} parent=1 // pred_check
      _
    $region7: #{tpu_custom_call.1} parent=1 // pred_check_branch
      %32 = sbr.rel (0) target = $region9
    $region8: #{tpu_custom_call.1} parent=1 // pred_region
      _
    $region9: #{tpu_custom_call.1} parent=1 // pred_fallthru
      _
    // Predicated region
    $region10: #{tpu_custom_call.1} parent=1 // pred_check
      _
    $region11: #{tpu_custom_call.1} parent=1 // pred_check_branch
      %34 = sbr.rel (0) target = $region13
    $region12: #{tpu_custom_call.1} parent=1 // pred_region
      _
    $region13: #{tpu_custom_call.1} parent=1 // pred_fallthru
      _
    // Predicated region
    $region14: #{tpu_custom_call.1} parent=1 // pred_check
      _
    $region15: #{tpu_custom_call.1} parent=1 // pred_check_branch
      %36 = sbr.rel (0) target = $region17
    $region16: #{tpu_custom_call.1} parent=1 // pred_region
      _
    $region17: #{tpu_custom_call.1} parent=1 // pred_fallthru
      _
    // Predicated region
    $region18: #{tpu_custom_call.1} parent=1 // pred_check
      _
    $region19: #{tpu_custom_call.1} parent=1 // pred_check_branch
      %38 = sbr.rel (0) target = $region21
    $region20: #{tpu_custom_call.1} parent=1 // pred_region
      %40 = vsyncadd [#allocation6], 0
      %s41 = sshll.u32 %s4, 4
      %s42 = int_to_ptr.hbm [resolvable:$true] %s41
      %s43 = sshll.u32 [#allocation5], 4
      %s44 = int_to_ptr.vmem [resolvable:$true] %s43
      %49 = dma.hbm_to_vmem [thread:$0]  %s42, 512, %s44, [#allocation6], 64, 64, 4
    $region21: #{tpu_custom_call.1} parent=1 // pred_fallthru
      _
    // Predicated region
    $region22: #{tpu_custom_call.1} parent=1 // pred_check
      _
    $region23: #{tpu_custom_call.1} parent=1 // pred_check_branch
      %51 = sbr.rel (0) target = $region25
    $region24: #{tpu_custom_call.1} parent=1 // pred_region
      %53 = vsyncadd [#allocation6], 0
      %s54 = sshll.u32 %s5, 4
      %s55 = int_to_ptr.hbm [resolvable:$true] %s54
      %s56 = sshll.u32 [#allocation7], 4
      %s57 = int_to_ptr.vmem [resolvable:$true] %s56
      %62 = dma.hbm_to_vmem [thread:$0]  %s55, 512, %s57, [#allocation6], 64, 64, 4
    $region25: #{tpu_custom_call.1} parent=1 // pred_fallthru
      _
    // Predicated region
    $region26: #{tpu_custom_call.1} parent=1 // pred_check
      _
    $region27: #{tpu_custom_call.1} parent=1 // pred_check_branch
      %64 = sbr.rel (0) target = $region29
    $region28: #{tpu_custom_call.1} parent=1 // pred_region
      %66 = vsyncadd [#allocation9], 0
      %s67 = sshll.u32 %s6, 4
      %s68 = int_to_ptr.hbm [resolvable:$true] %s67
      %s69 = sshll.u32 [#allocation8], 4
      %s70 = int_to_ptr.vmem [resolvable:$true] %s69
      %75 = dma.hbm_to_vmem [thread:$0]  %s68, 32, %s70, [#allocation9], 16, 16, 1
    $region29: #{tpu_custom_call.1} parent=1 // pred_fallthru
      _
    // Predicated region
    $region30: #{tpu_custom_call.1} parent=1 // pred_check
      _
    $region31: #{tpu_custom_call.1} parent=1 // pred_check_branch
      %77 = sbr.rel (0) target = $region33
    $region32: #{tpu_custom_call.1} parent=1 // pred_region
      _
    $region33: #{tpu_custom_call.1} parent=1 // pred_fallthru
      _
    // Predicated region
    $region34: #{tpu_custom_call.1} parent=1 // pred_check
      _
    $region35: #{tpu_custom_call.1} parent=1 // pred_check_branch
      %79 = sbr.rel (0) target = $region37
    $region36: #{tpu_custom_call.1} parent=1 // pred_region
      _
    $region37: #{tpu_custom_call.1} parent=1 // pred_fallthru
      _
    // Predicated region
    $region38: #{tpu_custom_call.1} parent=1 // pred_check
      _
    $region39: #{tpu_custom_call.1} parent=1 // pred_check_branch
      %81 = sbr.rel (0) target = $region41
    $region40: #{tpu_custom_call.1} parent=1 // pred_region
      %83 = dma.done [#allocation3], 256
    $region41: #{tpu_custom_call.1} parent=1 // pred_fallthru
      _
    // Predicated region
    $region42: #{tpu_custom_call.1} parent=1 // pred_check
      _
    $region43: #{tpu_custom_call.1} parent=1 // pred_check_branch
      %85 = sbr.rel (0) target = $region45
    $region44: #{tpu_custom_call.1} parent=1 // pred_region
      %87 = dma.done [#allocation6], 512
    $region45: #{tpu_custom_call.1} parent=1 // pred_fallthru
      _
    // Predicated region
    $region46: #{tpu_custom_call.1} parent=1 // pred_check
      _
    $region47: #{tpu_custom_call.1} parent=1 // pred_check_branch
      %89 = sbr.rel (0) target = $region49
    $region48: #{tpu_custom_call.1} parent=1 // pred_region
      %91 = dma.done [#allocation6], 512
    $region49: #{tpu_custom_call.1} parent=1 // pred_fallthru
      _
    // Predicated region
    $region50: #{tpu_custom_call.1} parent=1 // pred_check
      _
    $region51: #{tpu_custom_call.1} parent=1 // pred_check_branch
      %93 = sbr.rel (0) target = $region53
    $region52: #{tpu_custom_call.1} parent=1 // pred_region
      %95 = dma.done [#allocation9], 32
    $region53: #{tpu_custom_call.1} parent=1 // pred_fallthru
      _
    %v97 = vld [vmem:[#allocation2] sm:$0xff]
    %v98 = vld [vmem:[#allocation2 + $0x8] sm:$0xff]
    %v99 = vld [vmem:[%s1] sm:$0xff]
    %v100 = vld [vmem:[%s1 + $0x8] sm:$0xff]
    %v101 = vld [vmem:[%s1 + $0x10] sm:$0xff]
    %v102 = vld [vmem:[%s1 + $0x18] sm:$0xff]
    %v103 = vld [vmem:[%s1 + $0x20] sm:$0xff]
    %v104 = vld [vmem:[%s1 + $0x28] sm:$0xff]
    %v105 = vld [vmem:[%s1 + $0x30] sm:$0xff]
    %v106 = vld [vmem:[%s1 + $0x38] sm:$0xff]
    %v107 = vld [vmem:[%s8] sm:$0x3f]
    %v108 = vpack.c.bf16 %v98, %v97
    %v109 = vld [vmem:[%s2] sm:$0xf]
    %v110 = vld [vmem:[%s2 + $0x4] sm:$0xf]
    %v111 = vld [vmem:[%s2 + $0x8] sm:$0xf]
    %v112 = vld [vmem:[%s2 + $0xc] sm:$0xf]
    %v113 = vld [vmem:[%s3] sm:$0x1]
    %v115 = vperm.slane %v113, 0
    %v121 = vunpack.c.l.b16 %v109
    %v122 = vunpack.c.l.b16 %v110
    %v123 = vunpack.c.l.b16 %v111
    %v124 = vunpack.c.l.b16 %v112
    %v125 = vpack.c.b16 %v122, %v121
    %v126 = vpack.c.b16 %v124, %v123
    %vm129 = vcmask 261120
    %v131 = vsel %vm129, %v108, 0
    %133 = vmatpush.bf16.msra.mxu0 0
    %134 = vmatpush.bf16.msra.mxu0 0
    %135 = vmatpush.bf16.msra.mxu0 0
    %136 = vmatpush.bf16.msra.mxu0 0
    %137 = vmatpush.bf16.msra.mxu0 0
    %138 = vmatpush.bf16.msra.mxu0 0
    %139 = vmatpush.bf16.msra.mxu0 %v126
    %140 = vmatpush.bf16.msra.mxu0 %v125
    %141 = vmatmul.bf16.gmra.mxu0 %v131
    %v142 = vpop.f32.mrf.mxu0
    %v143 = vadd.f32 %v115, %v142
    %v144 = vpop.f32.mrf.mxu0
    %v145 = vadd.f32 %v115, %v144
    %146 = vdwg.mxu0
    %148 = vrot.lane.b32.xlu0 %v143, 120
    %v149 = vpop.permute.xlu0 %148
    %151 = vrot.lane.b32.xlu0 %v143, 112
    %v152 = vpop.permute.xlu0 %151
    %154 = vrot.lane.b32.xlu0 %v143, 104
    %v155 = vpop.permute.xlu0 %154
    %158 = vrot.lane.b32.xlu0 %v145, 120
    %v159 = vpop.permute.xlu0 %158
    %161 = vrot.lane.b32.xlu0 %v145, 112
    %v162 = vpop.permute.xlu0 %161
    %164 = vrot.lane.b32.xlu0 %v145, 104
    %v165 = vpop.permute.xlu0 %164
    %v167 = vmul.f32 %v143, 0.35355338
    %v168 = vmul.f32 %v149, 0.35355338
    %v169 = vmul.f32 %v152, 0.35355338
    %v170 = vmul.f32 %v155, 0.35355338
    %v171 = vmul.f32 %v145, 0.35355338
    %v172 = vmul.f32 %v159, 0.35355338
    %v173 = vmul.f32 %v162, 0.35355338
    %v174 = vmul.f32 %v165, 0.35355338
    %v175 = vpack.c.bf16 %v168, %v167
    %v176 = vpack.c.bf16 %v170, %v169
    %v177 = vpack.c.bf16 %v172, %v171
    %v178 = vpack.c.bf16 %v174, %v173
    %v179 = vpack.c.bf16 %v149, %v143
    %v180 = vpack.c.bf16 %v155, %v152
    %v181 = vpack.c.bf16 %v159, %v145
    %v182 = vpack.c.bf16 %v165, %v162
    %187 = vrot.lane.b32.xlu0 %v179, 96
    %v188 = vpop.permute.xlu0 %187
    %189 = vrot.lane.b32.xlu0 %v180, 96
    %v190 = vpop.permute.xlu0 %189
    %191 = vrot.lane.b32.xlu0 %v181, 96
    %v192 = vpop.permute.xlu0 %191
    %193 = vrot.lane.b32.xlu0 %v182, 96
    %v194 = vpop.permute.xlu0 %193
    %vm195 = vcmask 64512
    %v197 = vsel %vm195, %v175, 0
    %v200 = vsel %vm195, %v176, 0
    %v203 = vsel %vm195, %v177, 0
    %v206 = vsel %vm195, %v178, 0
    %v209 = vsel %vm195, %v188, 0
    %v212 = vsel %vm195, %v190, 0
    %v215 = vsel %vm195, %v192, 0
    %v218 = vsel %vm195, %v194, 0
    %220 = vmatpush.bf16.xpose.msra.mxu0 0
    %221 = vmatpush.bf16.xpose.msra.mxu0 0
    %222 = vmatpush.bf16.xpose.msra.mxu0 0
    %223 = vmatpush.bf16.xpose.msra.mxu0 0
    %224 = vmatpush.bf16.xpose.msra.mxu0 %v218
    %225 = vmatpush.bf16.xpose.msra.mxu0 %v215
    %226 = vmatpush.bf16.xpose.msra.mxu0 %v212
    %227 = vmatpush.bf16.xpose.msra.mxu0 %v209
    %228 = vmatmul.bf16.gmra.mxu0 %v197
    %v229 = vpop.f32.mrf.mxu0
    %v230 = vadd.f32 %v99, %v229
    %v231 = vpop.f32.mrf.mxu0
    %v232 = vadd.f32 %v100, %v231
    %233 = vmatmul.bf16.gmra.mxu0 %v200
    %v234 = vpop.f32.mrf.mxu0
    %v235 = vadd.f32 %v101, %v234
    %v236 = vpop.f32.mrf.mxu0
    %v237 = vadd.f32 %v102, %v236
    %238 = vmatmul.bf16.gmra.mxu0 %v203
    %v239 = vpop.f32.mrf.mxu0
    %v240 = vadd.f32 %v103, %v239
    %v241 = vpop.f32.mrf.mxu0
    %v242 = vadd.f32 %v104, %v241
    %243 = vmatmul.bf16.gmra.mxu0 %v206
    %v244 = vpop.f32.mrf.mxu0
    %v245 = vadd.f32 %v105, %v244
    %v246 = vpop.f32.mrf.mxu0
    %v247 = vadd.f32 %v106, %v246
    %248 = vdwg.mxu0
    %vm249 = vcmask 523264
    %v250 = vsel %vm249, %v230, -inf
    %251 = vmax.xlane.f32.xlu0 %v250
    %v252 = vpop.xlane.xlu0 %251
    %v253 = vsel %vm249, %v232, -inf
    %254 = vmax.xlane.f32.xlu0 %v253
    %v255 = vpop.xlane.xlu0 %254
    %v256 = vsel %vm249, %v235, -inf
    %257 = vmax.xlane.f32.xlu0 %v256
    %v258 = vpop.xlane.xlu0 %257
    %v259 = vsel %vm249, %v237, -inf
    %260 = vmax.xlane.f32.xlu0 %v259
    %v261 = vpop.xlane.xlu0 %260
    %v262 = vsel %vm249, %v240, -inf
    %263 = vmax.xlane.f32.xlu0 %v262
    %v264 = vpop.xlane.xlu0 %263
    %v265 = vsel %vm249, %v242, -inf
    %266 = vmax.xlane.f32.xlu0 %v265
    %v267 = vpop.xlane.xlu0 %266
    %v268 = vsel %vm249, %v245, -inf
    %269 = vmax.xlane.f32.xlu0 %v268
    %v270 = vpop.xlane.xlu0 %269
    %v271 = vsel %vm249, %v247, -inf
    %272 = vmax.xlane.f32.xlu0 %v271
    %v273 = vpop.xlane.xlu0 %272
    %v274 = vsub.f32 %v230, %v252
    %v275 = vsub.f32 %v232, %v255
    %v276 = vsub.f32 %v235, %v258
    %v277 = vsub.f32 %v237, %v261
    %v278 = vsub.f32 %v240, %v264
    %v279 = vsub.f32 %v242, %v267
    %v280 = vsub.f32 %v245, %v270
    %v281 = vsub.f32 %v247, %v273
    %v282 = vmul.f32 %v274, 1.442695
    %v283 = vpow.pop %v282
    %v284 = vmul.f32 %v275, 1.442695
    %v285 = vpow.pop %v284
    %v286 = vmul.f32 %v276, 1.442695
    %v287 = vpow.pop %v286
    %v288 = vmul.f32 %v277, 1.442695
    %v289 = vpow.pop %v288
    %v290 = vmul.f32 %v278, 1.442695
    %v291 = vpow.pop %v290
    %v292 = vmul.f32 %v279, 1.442695
    %v293 = vpow.pop %v292
    %v294 = vmul.f32 %v280, 1.442695
    %v295 = vpow.pop %v294
    %v296 = vmul.f32 %v281, 1.442695
    %v297 = vpow.pop %v296
    %v298 = vsel %vm249, %v283, 0.0
    %299 = vadd.xlane.f32.xlu0 %v298
    %v300 = vpop.xlane.xlu0 %299
    %v301 = vsel %vm249, %v285, 0.0
    %302 = vadd.xlane.f32.xlu0 %v301
    %v303 = vpop.xlane.xlu0 %302
    %v304 = vsel %vm249, %v287, 0.0
    %305 = vadd.xlane.f32.xlu0 %v304
    %v306 = vpop.xlane.xlu0 %305
    %v307 = vsel %vm249, %v289, 0.0
    %308 = vadd.xlane.f32.xlu0 %v307
    %v309 = vpop.xlane.xlu0 %308
    %v310 = vsel %vm249, %v291, 0.0
    %311 = vadd.xlane.f32.xlu0 %v310
    %v312 = vpop.xlane.xlu0 %311
    %v313 = vsel %vm249, %v293, 0.0
    %314 = vadd.xlane.f32.xlu0 %v313
    %v315 = vpop.xlane.xlu0 %314
    %v316 = vsel %vm249, %v295, 0.0
    %317 = vadd.xlane.f32.xlu0 %v316
    %v318 = vpop.xlane.xlu0 %317
    %v319 = vsel %vm249, %v297, 0.0
    %320 = vadd.xlane.f32.xlu0 %v319
    %v321 = vpop.xlane.xlu0 %320
    %v322 = vrcp.pop %v300
    %v323 = vmul.f32 %v300, %v322
    %v324 = vsub.f32 1.0, %v323
    %v325 = vmul.f32 %v322, %v324
    %v326 = vadd.f32 %v322, %v325
    %vm327 = vweird.f32 %v300
    %vm328 = vweird.f32 %v322
    %vm329 = vmor %vm327, %vm328
    %v330 = vsel %vm329, %v322, %v326
    %v331 = vand.u32 2147483647, %v300
    %vm332 = vcmp.eq.f32.partialorder %v331, 8.507059e+37
    %v333 = vand.u32 %v300, 2147483648
    %v334 = vor.u32 1.1754944e-38, %v333
    %v335 = vsel %vm332, %v334, %v330
    %v336 = vmul.f32 %v283, %v335
    %v337 = vrcp.pop %v303
    %v338 = vmul.f32 %v303, %v337
    %v339 = vsub.f32 1.0, %v338
    %v340 = vmul.f32 %v337, %v339
    %v341 = vadd.f32 %v337, %v340
    %vm342 = vweird.f32 %v303
    %vm343 = vweird.f32 %v337
    %vm344 = vmor %vm342, %vm343
    %v345 = vsel %vm344, %v337, %v341
    %v346 = vand.u32 2147483647, %v303
    %vm347 = vcmp.eq.f32.partialorder %v346, 8.507059e+37
    %v348 = vand.u32 %v303, 2147483648
    %v349 = vor.u32 1.1754944e-38, %v348
    %v350 = vsel %vm347, %v349, %v345
    %v351 = vmul.f32 %v285, %v350
    %v352 = vrcp.pop %v306
    %v353 = vmul.f32 %v306, %v352
    %v354 = vsub.f32 1.0, %v353
    %v355 = vmul.f32 %v352, %v354
    %v356 = vadd.f32 %v352, %v355
    %vm357 = vweird.f32 %v306
    %vm358 = vweird.f32 %v352
    %vm359 = vmor %vm357, %vm358
    %v360 = vsel %vm359, %v352, %v356
    %v361 = vand.u32 2147483647, %v306
    %vm362 = vcmp.eq.f32.partialorder %v361, 8.507059e+37
    %v363 = vand.u32 %v306, 2147483648
    %v364 = vor.u32 1.1754944e-38, %v363
    %v365 = vsel %vm362, %v364, %v360
    %v366 = vmul.f32 %v287, %v365
    %v367 = vrcp.pop %v309
    %v368 = vmul.f32 %v309, %v367
    %v369 = vsub.f32 1.0, %v368
    %v370 = vmul.f32 %v367, %v369
    %v371 = vadd.f32 %v367, %v370
    %vm372 = vweird.f32 %v309
    %vm373 = vweird.f32 %v367
    %vm374 = vmor %vm372, %vm373
    %v375 = vsel %vm374, %v367, %v371
    %v376 = vand.u32 2147483647, %v309
    %vm377 = vcmp.eq.f32.partialorder %v376, 8.507059e+37
    %v378 = vand.u32 %v309, 2147483648
    %v379 = vor.u32 1.1754944e-38, %v378
    %v380 = vsel %vm377, %v379, %v375
    %v381 = vmul.f32 %v289, %v380
    %v382 = vrcp.pop %v312
    %v383 = vmul.f32 %v312, %v382
    %v384 = vsub.f32 1.0, %v383
    %v385 = vmul.f32 %v382, %v384
    %v386 = vadd.f32 %v382, %v385
    %vm387 = vweird.f32 %v312
    %vm388 = vweird.f32 %v382
    %vm389 = vmor %vm387, %vm388
    %v390 = vsel %vm389, %v382, %v386
    %v391 = vand.u32 2147483647, %v312
    %vm392 = vcmp.eq.f32.partialorder %v391, 8.507059e+37
    %v393 = vand.u32 %v312, 2147483648
    %v394 = vor.u32 1.1754944e-38, %v393
    %v395 = vsel %vm392, %v394, %v390
    %v396 = vmul.f32 %v291, %v395
    %v397 = vrcp.pop %v315
    %v398 = vmul.f32 %v315, %v397
    %v399 = vsub.f32 1.0, %v398
    %v400 = vmul.f32 %v397, %v399
    %v401 = vadd.f32 %v397, %v400
    %vm402 = vweird.f32 %v315
    %vm403 = vweird.f32 %v397
    %vm404 = vmor %vm402, %vm403
    %v405 = vsel %vm404, %v397, %v401
    %v406 = vand.u32 2147483647, %v315
    %vm407 = vcmp.eq.f32.partialorder %v406, 8.507059e+37
    %v408 = vand.u32 %v315, 2147483648
    %v409 = vor.u32 1.1754944e-38, %v408
    %v410 = vsel %vm407, %v409, %v405
    %v411 = vmul.f32 %v293, %v410
    %v412 = vrcp.pop %v318
    %v413 = vmul.f32 %v318, %v412
    %v414 = vsub.f32 1.0, %v413
    %v415 = vmul.f32 %v412, %v414
    %v416 = vadd.f32 %v412, %v415
    %vm417 = vweird.f32 %v318
    %vm418 = vweird.f32 %v412
    %vm419 = vmor %vm417, %vm418
    %v420 = vsel %vm419, %v412, %v416
    %v421 = vand.u32 2147483647, %v318
    %vm422 = vcmp.eq.f32.partialorder %v421, 8.507059e+37
    %v423 = vand.u32 %v318, 2147483648
    %v424 = vor.u32 1.1754944e-38, %v423
    %v425 = vsel %vm422, %v424, %v420
    %v426 = vmul.f32 %v295, %v425
    %v427 = vrcp.pop %v321
    %v428 = vmul.f32 %v321, %v427
    %v429 = vsub.f32 1.0, %v428
    %v430 = vmul.f32 %v427, %v429
    %v431 = vadd.f32 %v427, %v430
    %vm432 = vweird.f32 %v321
    %vm433 = vweird.f32 %v427
    %vm434 = vmor %vm432, %vm433
    %v435 = vsel %vm434, %v427, %v431
    %v436 = vand.u32 2147483647, %v321
    %vm437 = vcmp.eq.f32.partialorder %v436, 8.507059e+37
    %v438 = vand.u32 %v321, 2147483648
    %v439 = vor.u32 1.1754944e-38, %v438
    %v440 = vsel %vm437, %v439, %v435
    %v441 = vmul.f32 %v297, %v440
    %v442 = vpack.c.bf16 %v351, %v336
    %v443 = vpack.c.bf16 %v381, %v366
    %v444 = vpack.c.bf16 %v411, %v396
    %v445 = vpack.c.bf16 %v441, %v426
    %446 = vrot.lane.b32.xlu0 %v179, 64
    %v447 = vpop.permute.xlu0 %446
    %448 = vrot.lane.b32.xlu0 %v180, 64
    %v449 = vpop.permute.xlu0 %448
    %450 = vrot.lane.b32.xlu0 %v181, 64
    %v451 = vpop.permute.xlu0 %450
    %452 = vrot.lane.b32.xlu0 %v182, 64
    %v453 = vpop.permute.xlu0 %452
    %v459 = vsel %vm249, %v442, 0
    %v462 = vsel %vm249, %v443, 0
    %v465 = vsel %vm249, %v444, 0
    %v468 = vsel %vm249, %v445, 0
    %470 = vmatpush.bf16.msra.mxu0 0
    %471 = vmatpush.bf16.msra.mxu0 0
    %472 = vmatpush.bf16.msra.mxu0 0
    %473 = vmatpush.bf16.msra.mxu0 0
    %474 = vmatpush.bf16.msra.mxu0 %v453
    %475 = vmatpush.bf16.msra.mxu0 %v451
    %476 = vmatpush.bf16.msra.mxu0 %v449
    %477 = vmatpush.bf16.msra.mxu0 %v447
    %478 = vmatmul.bf16.gmra.mxu0 %v459
    %v479 = vpop.f32.mrf.mxu0
    %v480 = vadd.f32 0.0, %v479
    %v481 = vpop.f32.mrf.mxu0
    %v482 = vadd.f32 0.0, %v481
    %483 = vmatmul.bf16.gmra.mxu0 %v462
    %v484 = vpop.f32.mrf.mxu0
    %v485 = vadd.f32 0.0, %v484
    %v486 = vpop.f32.mrf.mxu0
    %v487 = vadd.f32 0.0, %v486
    %488 = vmatmul.bf16.gmra.mxu0 %v465
    %v489 = vpop.f32.mrf.mxu0
    %v490 = vadd.f32 0.0, %v489
    %v491 = vpop.f32.mrf.mxu0
    %v492 = vadd.f32 0.0, %v491
    %493 = vmatmul.bf16.gmra.mxu0 %v468
    %v494 = vpop.f32.mrf.mxu0
    %v495 = vadd.f32 0.0, %v494
    %v496 = vpop.f32.mrf.mxu0
    %v497 = vadd.f32 0.0, %v496
    %498 = vdwg.mxu0
    %500 = vrot.lane.b32.xlu0 %v482, 8
    %v501 = vpop.permute.xlu0 %500
    %504 = vrot.lane.b32.xlu0 %v485, 16
    %v505 = vpop.permute.xlu0 %504
    %508 = vrot.lane.b32.xlu0 %v487, 24
    %v509 = vpop.permute.xlu0 %508
    %v511 = vsel %vm195, %v480, %v501
    %vm512 = vcmask 130048
    %v513 = vsel %vm512, %v511, %v505
    %vm514 = vcmask 195584
    %v515 = vsel %vm514, %v513, %v509
    %517 = vrot.lane.b32.xlu0 %v492, 8
    %v518 = vpop.permute.xlu0 %517
    %521 = vrot.lane.b32.xlu0 %v495, 16
    %v522 = vpop.permute.xlu0 %521
    %525 = vrot.lane.b32.xlu0 %v497, 24
    %v526 = vpop.permute.xlu0 %525
    %v528 = vsel %vm195, %v490, %v518
    %v529 = vsel %vm512, %v528, %v522
    %v530 = vsel %vm514, %v529, %v526
    %v531 = vpack.c.bf16 %v530, %v515
    %v532 = vld [vmem:[#allocation5] sm:$0xf]
    %v533 = vld [vmem:[#allocation5 + $0x4] sm:$0xf]
    %v534 = vld [vmem:[#allocation5 + $0x8] sm:$0xf]
    %v535 = vld [vmem:[#allocation5 + $0xc] sm:$0xf]
    %v536 = vperm.slane %v107, 0
    %v541 = vunpack.c.l.b16 %v532
    %v542 = vunpack.c.l.b16 %v533
    %v543 = vunpack.c.l.b16 %v534
    %v544 = vunpack.c.l.b16 %v535
    %v545 = vpack.c.b16 %v542, %v541
    %v546 = vpack.c.b16 %v544, %v543
    %v550 = vsel %vm129, %v531, 0
    %552 = vmatpush.bf16.msra.mxu0 0
    %553 = vmatpush.bf16.msra.mxu0 0
    %554 = vmatpush.bf16.msra.mxu0 0
    %555 = vmatpush.bf16.msra.mxu0 0
    %556 = vmatpush.bf16.msra.mxu0 0
    %557 = vmatpush.bf16.msra.mxu0 0
    %558 = vmatpush.bf16.msra.mxu0 %v546
    %559 = vmatpush.bf16.msra.mxu0 %v545
    %560 = vmatmul.bf16.gmra.mxu0 %v550
    %v561 = vpop.f32.mrf.mxu0
    %v562 = vadd.f32 %v536, %v561
    %v563 = vpop.f32.mrf.mxu0
    %v564 = vadd.f32 %v536, %v563
    %565 = vdwg.mxu0
    %v566 = vadd.f32 %v97, %v562
    %v567 = vadd.f32 %v98, %v564
    %v568 = vsel %vm129, %v566, 0.0
    %569 = vadd.xlane.f32.xlu0 %v568
    %v570 = vpop.xlane.xlu0 %569
    %v571 = vsel %vm129, %v567, 0.0
    %572 = vadd.xlane.f32.xlu0 %v571
    %v573 = vpop.xlane.xlu0 %572
    %v574 = vrcp.pop 32.0
    %v575 = vmul.f32 32.0, %v574
    %v576 = vsub.f32 1.0, %v575
    %v577 = vmul.f32 %v574, %v576
    %v578 = vadd.f32 %v574, %v577
    %vm579 = vweird.f32 %v574
    %v580 = vsel %vm579, %v574, %v578
    %v581 = vmul.f32 %v570, %v580
    %v582 = vmul.f32 %v573, %v580
    %v583 = vsub.f32 %v566, %v581
    %v584 = vsub.f32 %v567, %v582
    %v585 = vmul.f32 %v583, %v583
    %v586 = vmul.f32 %v584, %v584
    %v587 = vsel %vm129, %v585, 0.0
    %588 = vadd.xlane.f32.xlu0 %v587
    %v589 = vpop.xlane.xlu0 %588
    %v590 = vsel %vm129, %v586, 0.0
    %591 = vadd.xlane.f32.xlu0 %v590
    %v592 = vpop.xlane.xlu0 %591
    %v593 = vmul.f32 %v589, %v580
    %v594 = vmul.f32 %v592, %v580
    %v595 = vadd.f32 %v593, 1e-05
    %v596 = vadd.f32 %v594, 1e-05
    %v597 = vrsqrt.pop %v595
    %v598 = vmul.f32 %v597, %v595
    %v599 = vmul.f32 %v598, %v597
    %v600 = vmul.f32 0.5, %v599
    %v601 = vsub.f32 1.5, %v600
    %v602 = vmul.f32 %v597, %v601
    %vm603 = vweird.f32 %v595
    %vm604 = vweird.f32 %v597
    %vm605 = vmor %vm603, %vm604
    %v606 = vsel %vm605, %v597, %v602
    %v607 = vrsqrt.pop %v596
    %v608 = vmul.f32 %v607, %v596
    %v609 = vmul.f32 %v608, %v607
    %v610 = vmul.f32 0.5, %v609
    %v611 = vsub.f32 1.5, %v610
    %v612 = vmul.f32 %v607, %v611
    %vm613 = vweird.f32 %v596
    %vm614 = vweird.f32 %v607
    %vm615 = vmor %vm613, %vm614
    %v616 = vsel %vm615, %v607, %v612
    %v617 = vmul.f32 %v583, %v606
    %v618 = vmul.f32 %v584, %v616
    %v619 = vperm.slane %v107, 1
    %v620 = vmul.f32 %v617, %v619
    %v621 = vmul.f32 %v618, %v619
    %v622 = vperm.slane %v107, 2
    %v623 = vadd.f32 %v620, %v622
    %v624 = vadd.f32 %v621, %v622
    %v625 = vpack.c.bf16 %v624, %v623
    %v626 = vld [vmem:[#allocation7] sm:$0xf]
    %v627 = vld [vmem:[#allocation7 + $0x4] sm:$0xf]
    %v628 = vld [vmem:[#allocation7 + $0x8] sm:$0xf]
    %v629 = vld [vmem:[#allocation7 + $0xc] sm:$0xf]
    %v630 = vld [vmem:[#allocation8] sm:$0x1]
    %v632 = vperm.slane %v630, 0
    %v638 = vunpack.c.l.b16 %v626
    %v639 = vunpack.c.l.b16 %v627
    %v640 = vunpack.c.l.b16 %v628
    %v641 = vunpack.c.l.b16 %v629
    %v642 = vpack.c.b16 %v639, %v638
    %v643 = vpack.c.b16 %v641, %v640
    %v647 = vsel %vm129, %v625, 0
    %649 = vmatpush.bf16.msra.mxu0 0
    %650 = vmatpush.bf16.msra.mxu0 0
    %651 = vmatpush.bf16.msra.mxu0 0
    %652 = vmatpush.bf16.msra.mxu0 0
    %653 = vmatpush.bf16.msra.mxu0 0
    %654 = vmatpush.bf16.msra.mxu0 0
    %655 = vmatpush.bf16.msra.mxu0 %v643
    %656 = vmatpush.bf16.msra.mxu0 %v642
    %657 = vmatmul.bf16.gmra.mxu0 %v647
    %v658 = vpop.f32.mrf.mxu0
    %v659 = vadd.f32 %v632, %v658
    %v660 = vpop.f32.mrf.mxu0
    %v661 = vadd.f32 %v632, %v660
    %662 = vdwg.mxu0
    %v663 = vmax.f32 %v659, 0.0
    %v664 = vmax.f32 %v661, 0.0
    %v665 = vpack.c.bf16 %v664, %v663
    %v666 = vld [vmem:[%s7] sm:$0xf]
    %v667 = vld [vmem:[%s7 + $0x4] sm:$0xf]
    %v668 = vld [vmem:[%s7 + $0x8] sm:$0xf]
    %v669 = vld [vmem:[%s7 + $0xc] sm:$0xf]
    %v670 = vld [vmem:[%s7 + $0x10] sm:$0xf]
    %v671 = vld [vmem:[%s7 + $0x14] sm:$0xf]
    %v672 = vld [vmem:[%s7 + $0x18] sm:$0xf]
    %v673 = vld [vmem:[%s7 + $0x1c] sm:$0xf]
    %v674 = vperm.slane %v107, 3
    %v683 = vunpack.c.l.b16 %v666
    %v684 = vunpack.c.l.b16 %v667
    %v685 = vunpack.c.l.b16 %v668
    %v686 = vunpack.c.l.b16 %v669
    %v687 = vunpack.c.l.b16 %v670
    %v688 = vunpack.c.l.b16 %v671
    %v689 = vunpack.c.l.b16 %v672
    %v690 = vunpack.c.l.b16 %v673
    %v691 = vpack.c.b16 %v684, %v683
    %v692 = vpack.c.b16 %v686, %v685
    %v693 = vpack.c.b16 %v688, %v687
    %v694 = vpack.c.b16 %v690, %v689
    %v700 = vsel %vm249, %v665, 0
    %702 = vmatpush.bf16.msra.mxu0 0
    %703 = vmatpush.bf16.msra.mxu0 0
    %704 = vmatpush.bf16.msra.mxu0 0
    %705 = vmatpush.bf16.msra.mxu0 0
    %706 = vmatpush.bf16.msra.mxu0 %v694
    %707 = vmatpush.bf16.msra.mxu0 %v693
    %708 = vmatpush.bf16.msra.mxu0 %v692
    %709 = vmatpush.bf16.msra.mxu0 %v691
    %710 = vmatmul.bf16.gmra.mxu0 %v700
    %v711 = vpop.f32.mrf.mxu0
    %v712 = vadd.f32 %v674, %v711
    %v713 = vpop.f32.mrf.mxu0
    %v714 = vadd.f32 %v674, %v713
    %715 = vdwg.mxu0
    %v716 = vadd.f32 %v623, %v712
    %v717 = vadd.f32 %v624, %v714
    %v718 = vsel %vm129, %v716, 0.0
    %719 = vadd.xlane.f32.xlu0 %v718
    %v720 = vpop.xlane.xlu0 %719
    %v721 = vsel %vm129, %v717, 0.0
    %722 = vadd.xlane.f32.xlu0 %v721
    %v723 = vpop.xlane.xlu0 %722
    %v724 = vmul.f32 %v720, %v580
    %v725 = vmul.f32 %v723, %v580
    %v726 = vsub.f32 %v716, %v724
    %v727 = vsub.f32 %v717, %v725
    %v728 = vmul.f32 %v726, %v726
    %v729 = vmul.f32 %v727, %v727
    %v730 = vsel %vm129, %v728, 0.0
    %731 = vadd.xlane.f32.xlu0 %v730
    %v732 = vpop.xlane.xlu0 %731
    %v733 = vsel %vm129, %v729, 0.0
    %734 = vadd.xlane.f32.xlu0 %v733
    %v735 = vpop.xlane.xlu0 %734
    %v736 = vmul.f32 %v732, %v580
    %v737 = vmul.f32 %v735, %v580
    %v738 = vadd.f32 %v736, 1e-05
    %v739 = vadd.f32 %v737, 1e-05
    %v740 = vrsqrt.pop %v738
    %v741 = vmul.f32 %v740, %v738
    %v742 = vmul.f32 %v741, %v740
    %v743 = vmul.f32 0.5, %v742
    %v744 = vsub.f32 1.5, %v743
    %v745 = vmul.f32 %v740, %v744
    %vm746 = vweird.f32 %v738
    %vm747 = vweird.f32 %v740
    %vm748 = vmor %vm746, %vm747
    %v749 = vsel %vm748, %v740, %v745
    %v750 = vrsqrt.pop %v739
    %v751 = vmul.f32 %v750, %v739
    %v752 = vmul.f32 %v751, %v750
    %v753 = vmul.f32 0.5, %v752
    %v754 = vsub.f32 1.5, %v753
    %v755 = vmul.f32 %v750, %v754
    %vm756 = vweird.f32 %v739
    %vm757 = vweird.f32 %v750
    %vm758 = vmor %vm756, %vm757
    %v759 = vsel %vm758, %v750, %v755
    %v760 = vmul.f32 %v726, %v749
    %v761 = vmul.f32 %v727, %v759
    %v762 = vperm.slane %v107, 4
    %v763 = vmul.f32 %v760, %v762
    %v764 = vmul.f32 %v761, %v762
    %v765 = vperm.slane %v107, 5
    %v766 = vadd.f32 %v763, %v765
    %v767 = vadd.f32 %v764, %v765
    %s768 = scalar_lea.vmem %s8, 8
    %v769 = vld [vmem:[%s768] sm:$0x3f]
    %v770 = vpack.c.bf16 %v767, %v766
    %s771 = scalar_lea.vmem %s2, 16
    %v772 = vld [vmem:[%s771] sm:$0xf]
    %v773 = vld [vmem:[%s771 + $0x4] sm:$0xf]
    %v774 = vld [vmem:[%s771 + $0x8] sm:$0xf]
    %v775 = vld [vmem:[%s771 + $0xc] sm:$0xf]
    %s776 = scalar_lea.vmem %s3, 1
    %v777 = vld [vmem:[%s776] sm:$0x1]
    %v779 = vperm.slane %v777, 0
    %v785 = vunpack.c.l.b16 %v772
    %v786 = vunpack.c.l.b16 %v773
    %v787 = vunpack.c.l.b16 %v774
    %v788 = vunpack.c.l.b16 %v775
    %v789 = vpack.c.b16 %v786, %v785
    %v790 = vpack.c.b16 %v788, %v787
    %v794 = vsel %vm129, %v770, 0
    %796 = vmatpush.bf16.msra.mxu0 0
    %797 = vmatpush.bf16.msra.mxu0 0
    %798 = vmatpush.bf16.msra.mxu0 0
    %799 = vmatpush.bf16.msra.mxu0 0
    %800 = vmatpush.bf16.msra.mxu0 0
    %801 = vmatpush.bf16.msra.mxu0 0
    %802 = vmatpush.bf16.msra.mxu0 %v790
    %803 = vmatpush.bf16.msra.mxu0 %v789
    %804 = vmatmul.bf16.gmra.mxu0 %v794
    %v805 = vpop.f32.mrf.mxu0
    %v806 = vadd.f32 %v779, %v805
    %v807 = vpop.f32.mrf.mxu0
    %v808 = vadd.f32 %v779, %v807
    %809 = vdwg.mxu0
    %811 = vrot.lane.b32.xlu0 %v806, 120
    %v812 = vpop.permute.xlu0 %811
    %814 = vrot.lane.b32.xlu0 %v806, 112
    %v815 = vpop.permute.xlu0 %814
    %817 = vrot.lane.b32.xlu0 %v806, 104
    %v818 = vpop.permute.xlu0 %817
    %821 = vrot.lane.b32.xlu0 %v808, 120
    %v822 = vpop.permute.xlu0 %821
    %824 = vrot.lane.b32.xlu0 %v808, 112
    %v825 = vpop.permute.xlu0 %824
    %827 = vrot.lane.b32.xlu0 %v808, 104
    %v828 = vpop.permute.xlu0 %827
    %v830 = vmul.f32 %v806, 0.35355338
    %v831 = vmul.f32 %v812, 0.35355338
    %v832 = vmul.f32 %v815, 0.35355338
    %v833 = vmul.f32 %v818, 0.35355338
    %v834 = vmul.f32 %v808, 0.35355338
    %v835 = vmul.f32 %v822, 0.35355338
    %v836 = vmul.f32 %v825, 0.35355338
    %v837 = vmul.f32 %v828, 0.35355338
    %v838 = vpack.c.bf16 %v831, %v830
    %v839 = vpack.c.bf16 %v833, %v832
    %v840 = vpack.c.bf16 %v835, %v834
    %v841 = vpack.c.bf16 %v837, %v836
    %v842 = vpack.c.bf16 %v812, %v806
    %v843 = vpack.c.bf16 %v818, %v815
    %v844 = vpack.c.bf16 %v822, %v808
    %v845 = vpack.c.bf16 %v828, %v825
    %850 = vrot.lane.b32.xlu0 %v842, 96
    %v851 = vpop.permute.xlu0 %850
    %852 = vrot.lane.b32.xlu0 %v843, 96
    %v853 = vpop.permute.xlu0 %852
    %854 = vrot.lane.b32.xlu0 %v844, 96
    %v855 = vpop.permute.xlu0 %854
    %856 = vrot.lane.b32.xlu0 %v845, 96
    %v857 = vpop.permute.xlu0 %856
    %v859 = vsel %vm195, %v838, 0
    %v862 = vsel %vm195, %v839, 0
    %v865 = vsel %vm195, %v840, 0
    %v868 = vsel %vm195, %v841, 0
    %v871 = vsel %vm195, %v851, 0
    %v874 = vsel %vm195, %v853, 0
    %v877 = vsel %vm195, %v855, 0
    %v880 = vsel %vm195, %v857, 0
    %882 = vmatpush.bf16.xpose.msra.mxu0 0
    %883 = vmatpush.bf16.xpose.msra.mxu0 0
    %884 = vmatpush.bf16.xpose.msra.mxu0 0
    %885 = vmatpush.bf16.xpose.msra.mxu0 0
    %886 = vmatpush.bf16.xpose.msra.mxu0 %v880
    %887 = vmatpush.bf16.xpose.msra.mxu0 %v877
    %888 = vmatpush.bf16.xpose.msra.mxu0 %v874
    %889 = vmatpush.bf16.xpose.msra.mxu0 %v871
    %890 = vmatmul.bf16.gmra.mxu0 %v859
    %v891 = vpop.f32.mrf.mxu0
    %v892 = vadd.f32 %v99, %v891
    %v893 = vpop.f32.mrf.mxu0
    %v894 = vadd.f32 %v100, %v893
    %895 = vmatmul.bf16.gmra.mxu0 %v862
    %v896 = vpop.f32.mrf.mxu0
    %v897 = vadd.f32 %v101, %v896
    %v898 = vpop.f32.mrf.mxu0
    %v899 = vadd.f32 %v102, %v898
    %900 = vmatmul.bf16.gmra.mxu0 %v865
    %v901 = vpop.f32.mrf.mxu0
    %v902 = vadd.f32 %v103, %v901
    %v903 = vpop.f32.mrf.mxu0
    %v904 = vadd.f32 %v104, %v903
    %905 = vmatmul.bf16.gmra.mxu0 %v868
    %v906 = vpop.f32.mrf.mxu0
    %v907 = vadd.f32 %v105, %v906
    %v908 = vpop.f32.mrf.mxu0
    %v909 = vadd.f32 %v106, %v908
    %910 = vdwg.mxu0
    %v911 = vsel %vm249, %v892, -inf
    %912 = vmax.xlane.f32.xlu0 %v911
    %v913 = vpop.xlane.xlu0 %912
    %v914 = vsel %vm249, %v894, -inf
    %915 = vmax.xlane.f32.xlu0 %v914
    %v916 = vpop.xlane.xlu0 %915
    %v917 = vsel %vm249, %v897, -inf
    %918 = vmax.xlane.f32.xlu0 %v917
    %v919 = vpop.xlane.xlu0 %918
    %v920 = vsel %vm249, %v899, -inf
    %921 = vmax.xlane.f32.xlu0 %v920
    %v922 = vpop.xlane.xlu0 %921
    %v923 = vsel %vm249, %v902, -inf
    %924 = vmax.xlane.f32.xlu0 %v923
    %v925 = vpop.xlane.xlu0 %924
    %v926 = vsel %vm249, %v904, -inf
    %927 = vmax.xlane.f32.xlu0 %v926
    %v928 = vpop.xlane.xlu0 %927
    %v929 = vsel %vm249, %v907, -inf
    %930 = vmax.xlane.f32.xlu0 %v929
    %v931 = vpop.xlane.xlu0 %930
    %v932 = vsel %vm249, %v909, -inf
    %933 = vmax.xlane.f32.xlu0 %v932
    %v934 = vpop.xlane.xlu0 %933
    %v935 = vsub.f32 %v892, %v913
    %v936 = vsub.f32 %v894, %v916
    %v937 = vsub.f32 %v897, %v919
    %v938 = vsub.f32 %v899, %v922
    %v939 = vsub.f32 %v902, %v925
    %v940 = vsub.f32 %v904, %v928
    %v941 = vsub.f32 %v907, %v931
    %v942 = vsub.f32 %v909, %v934
    %v943 = vmul.f32 %v935, 1.442695
    %v944 = vpow.pop %v943
    %v945 = vmul.f32 %v936, 1.442695
    %v946 = vpow.pop %v945
    %v947 = vmul.f32 %v937, 1.442695
    %v948 = vpow.pop %v947
    %v949 = vmul.f32 %v938, 1.442695
    %v950 = vpow.pop %v949
    %v951 = vmul.f32 %v939, 1.442695
    %v952 = vpow.pop %v951
    %v953 = vmul.f32 %v940, 1.442695
    %v954 = vpow.pop %v953
    %v955 = vmul.f32 %v941, 1.442695
    %v956 = vpow.pop %v955
    %v957 = vmul.f32 %v942, 1.442695
    %v958 = vpow.pop %v957
    %v959 = vsel %vm249, %v944, 0.0
    %960 = vadd.xlane.f32.xlu0 %v959
    %v961 = vpop.xlane.xlu0 %960
    %v962 = vsel %vm249, %v946, 0.0
    %963 = vadd.xlane.f32.xlu0 %v962
    %v964 = vpop.xlane.xlu0 %963
    %v965 = vsel %vm249, %v948, 0.0
    %966 = vadd.xlane.f32.xlu0 %v965
    %v967 = vpop.xlane.xlu0 %966
    %v968 = vsel %vm249, %v950, 0.0
    %969 = vadd.xlane.f32.xlu0 %v968
    %v970 = vpop.xlane.xlu0 %969
    %v971 = vsel %vm249, %v952, 0.0
    %972 = vadd.xlane.f32.xlu0 %v971
    %v973 = vpop.xlane.xlu0 %972
    %v974 = vsel %vm249, %v954, 0.0
    %975 = vadd.xlane.f32.xlu0 %v974
    %v976 = vpop.xlane.xlu0 %975
    %v977 = vsel %vm249, %v956, 0.0
    %978 = vadd.xlane.f32.xlu0 %v977
    %v979 = vpop.xlane.xlu0 %978
    %v980 = vsel %vm249, %v958, 0.0
    %981 = vadd.xlane.f32.xlu0 %v980
    %v982 = vpop.xlane.xlu0 %981
    %v983 = vrcp.pop %v961
    %v984 = vmul.f32 %v961, %v983
    %v985 = vsub.f32 1.0, %v984
    %v986 = vmul.f32 %v983, %v985
    %v987 = vadd.f32 %v983, %v986
    %vm988 = vweird.f32 %v961
    %vm989 = vweird.f32 %v983
    %vm990 = vmor %vm988, %vm989
    %v991 = vsel %vm990, %v983, %v987
    %v992 = vand.u32 2147483647, %v961
    %vm993 = vcmp.eq.f32.partialorder %v992, 8.507059e+37
    %v994 = vand.u32 %v961, 2147483648
    %v995 = vor.u32 1.1754944e-38, %v994
    %v996 = vsel %vm993, %v995, %v991
    %v997 = vmul.f32 %v944, %v996
    %v998 = vrcp.pop %v964
    %v999 = vmul.f32 %v964, %v998
    %v1000 = vsub.f32 1.0, %v999
    %v1001 = vmul.f32 %v998, %v1000
    %v1002 = vadd.f32 %v998, %v1001
    %vm1003 = vweird.f32 %v964
    %vm1004 = vweird.f32 %v998
    %vm1005 = vmor %vm1003, %vm1004
    %v1006 = vsel %vm1005, %v998, %v1002
    %v1007 = vand.u32 2147483647, %v964
    %vm1008 = vcmp.eq.f32.partialorder %v1007, 8.507059e+37
    %v1009 = vand.u32 %v964, 2147483648
    %v1010 = vor.u32 1.1754944e-38, %v1009
    %v1011 = vsel %vm1008, %v1010, %v1006
    %v1012 = vmul.f32 %v946, %v1011
    %v1013 = vrcp.pop %v967
    %v1014 = vmul.f32 %v967, %v1013
    %v1015 = vsub.f32 1.0, %v1014
    %v1016 = vmul.f32 %v1013, %v1015
    %v1017 = vadd.f32 %v1013, %v1016
    %vm1018 = vweird.f32 %v967
    %vm1019 = vweird.f32 %v1013
    %vm1020 = vmor %vm1018, %vm1019
    %v1021 = vsel %vm1020, %v1013, %v1017
    %v1022 = vand.u32 2147483647, %v967
    %vm1023 = vcmp.eq.f32.partialorder %v1022, 8.507059e+37
    %v1024 = vand.u32 %v967, 2147483648
    %v1025 = vor.u32 1.1754944e-38, %v1024
    %v1026 = vsel %vm1023, %v1025, %v1021
    %v1027 = vmul.f32 %v948, %v1026
    %v1028 = vrcp.pop %v970
    %v1029 = vmul.f32 %v970, %v1028
    %v1030 = vsub.f32 1.0, %v1029
    %v1031 = vmul.f32 %v1028, %v1030
    %v1032 = vadd.f32 %v1028, %v1031
    %vm1033 = vweird.f32 %v970
    %vm1034 = vweird.f32 %v1028
    %vm1035 = vmor %vm1033, %vm1034
    %v1036 = vsel %vm1035, %v1028, %v1032
    %v1037 = vand.u32 2147483647, %v970
    %vm1038 = vcmp.eq.f32.partialorder %v1037, 8.507059e+37
    %v1039 = vand.u32 %v970, 2147483648
    %v1040 = vor.u32 1.1754944e-38, %v1039
    %v1041 = vsel %vm1038, %v1040, %v1036
    %v1042 = vmul.f32 %v950, %v1041
    %v1043 = vrcp.pop %v973
    %v1044 = vmul.f32 %v973, %v1043
    %v1045 = vsub.f32 1.0, %v1044
    %v1046 = vmul.f32 %v1043, %v1045
    %v1047 = vadd.f32 %v1043, %v1046
    %vm1048 = vweird.f32 %v973
    %vm1049 = vweird.f32 %v1043
    %vm1050 = vmor %vm1048, %vm1049
    %v1051 = vsel %vm1050, %v1043, %v1047
    %v1052 = vand.u32 2147483647, %v973
    %vm1053 = vcmp.eq.f32.partialorder %v1052, 8.507059e+37
    %v1054 = vand.u32 %v973, 2147483648
    %v1055 = vor.u32 1.1754944e-38, %v1054
    %v1056 = vsel %vm1053, %v1055, %v1051
    %v1057 = vmul.f32 %v952, %v1056
    %v1058 = vrcp.pop %v976
    %v1059 = vmul.f32 %v976, %v1058
    %v1060 = vsub.f32 1.0, %v1059
    %v1061 = vmul.f32 %v1058, %v1060
    %v1062 = vadd.f32 %v1058, %v1061
    %vm1063 = vweird.f32 %v976
    %vm1064 = vweird.f32 %v1058
    %vm1065 = vmor %vm1063, %vm1064
    %v1066 = vsel %vm1065, %v1058, %v1062
    %v1067 = vand.u32 2147483647, %v976
    %vm1068 = vcmp.eq.f32.partialorder %v1067, 8.507059e+37
    %v1069 = vand.u32 %v976, 2147483648
    %v1070 = vor.u32 1.1754944e-38, %v1069
    %v1071 = vsel %vm1068, %v1070, %v1066
    %v1072 = vmul.f32 %v954, %v1071
    %v1073 = vrcp.pop %v979
    %v1074 = vmul.f32 %v979, %v1073
    %v1075 = vsub.f32 1.0, %v1074
    %v1076 = vmul.f32 %v1073, %v1075
    %v1077 = vadd.f32 %v1073, %v1076
    %vm1078 = vweird.f32 %v979
    %vm1079 = vweird.f32 %v1073
    %vm1080 = vmor %vm1078, %vm1079
    %v1081 = vsel %vm1080, %v1073, %v1077
    %v1082 = vand.u32 2147483647, %v979
    %vm1083 = vcmp.eq.f32.partialorder %v1082, 8.507059e+37
    %v1084 = vand.u32 %v979, 2147483648
    %v1085 = vor.u32 1.1754944e-38, %v1084
    %v1086 = vsel %vm1083, %v1085, %v1081
    %v1087 = vmul.f32 %v956, %v1086
    %v1088 = vrcp.pop %v982
    %v1089 = vmul.f32 %v982, %v1088
    %v1090 = vsub.f32 1.0, %v1089
    %v1091 = vmul.f32 %v1088, %v1090
    %v1092 = vadd.f32 %v1088, %v1091
    %vm1093 = vweird.f32 %v982
    %vm1094 = vweird.f32 %v1088
    %vm1095 = vmor %vm1093, %vm1094
    %v1096 = vsel %vm1095, %v1088, %v1092
    %v1097 = vand.u32 2147483647, %v982
    %vm1098 = vcmp.eq.f32.partialorder %v1097, 8.507059e+37
    %v1099 = vand.u32 %v982, 2147483648
    %v1100 = vor.u32 1.1754944e-38, %v1099
    %v1101 = vsel %vm1098, %v1100, %v1096
    %v1102 = vmul.f32 %v958, %v1101
    %v1103 = vpack.c.bf16 %v1012, %v997
    %v1104 = vpack.c.bf16 %v1042, %v1027
    %v1105 = vpack.c.bf16 %v1072, %v1057
    %v1106 = vpack.c.bf16 %v1102, %v1087
    %1107 = vrot.lane.b32.xlu0 %v842, 64
    %v1108 = vpop.permute.xlu0 %1107
    %1109 = vrot.lane.b32.xlu0 %v843, 64
    %v1110 = vpop.permute.xlu0 %1109
    %1111 = vrot.lane.b32.xlu0 %v844, 64
    %v1112 = vpop.permute.xlu0 %1111
    %1113 = vrot.lane.b32.xlu0 %v845, 64
    %v1114 = vpop.permute.xlu0 %1113
    %v1120 = vsel %vm249, %v1103, 0
    %v1123 = vsel %vm249, %v1104, 0
    %v1126 = vsel %vm249, %v1105, 0
    %v1129 = vsel %vm249, %v1106, 0
    %1131 = vmatpush.bf16.msra.mxu0 0
    %1132 = vmatpush.bf16.msra.mxu0 0
    %1133 = vmatpush.bf16.msra.mxu0 0
    %1134 = vmatpush.bf16.msra.mxu0 0
    %1135 = vmatpush.bf16.msra.mxu0 %v1114
    %1136 = vmatpush.bf16.msra.mxu0 %v1112
    %1137 = vmatpush.bf16.msra.mxu0 %v1110
    %1138 = vmatpush.bf16.msra.mxu0 %v1108
    %1139 = vmatmul.bf16.gmra.mxu0 %v1120
    %v1140 = vpop.f32.mrf.mxu0
    %v1141 = vadd.f32 0.0, %v1140
    %v1142 = vpop.f32.mrf.mxu0
    %v1143 = vadd.f32 0.0, %v1142
    %1144 = vmatmul.bf16.gmra.mxu0 %v1123
    %v1145 = vpop.f32.mrf.mxu0
    %v1146 = vadd.f32 0.0, %v1145
    %v1147 = vpop.f32.mrf.mxu0
    %v1148 = vadd.f32 0.0, %v1147
    %1149 = vmatmul.bf16.gmra.mxu0 %v1126
    %v1150 = vpop.f32.mrf.mxu0
    %v1151 = vadd.f32 0.0, %v1150
    %v1152 = vpop.f32.mrf.mxu0
    %v1153 = vadd.f32 0.0, %v1152
    %1154 = vmatmul.bf16.gmra.mxu0 %v1129
    %v1155 = vpop.f32.mrf.mxu0
    %v1156 = vadd.f32 0.0, %v1155
    %v1157 = vpop.f32.mrf.mxu0
    %v1158 = vadd.f32 0.0, %v1157
    %1159 = vdwg.mxu0
    %1161 = vrot.lane.b32.xlu0 %v1143, 8
    %v1162 = vpop.permute.xlu0 %1161
    %1165 = vrot.lane.b32.xlu0 %v1146, 16
    %v1166 = vpop.permute.xlu0 %1165
    %1169 = vrot.lane.b32.xlu0 %v1148, 24
    %v1170 = vpop.permute.xlu0 %1169
    %v1172 = vsel %vm195, %v1141, %v1162
    %v1173 = vsel %vm512, %v1172, %v1166
    %v1174 = vsel %vm514, %v1173, %v1170
    %1176 = vrot.lane.b32.xlu0 %v1153, 8
    %v1177 = vpop.permute.xlu0 %1176
    %1180 = vrot.lane.b32.xlu0 %v1156, 16
    %v1181 = vpop.permute.xlu0 %1180
    %1184 = vrot.lane.b32.xlu0 %v1158, 24
    %v1185 = vpop.permute.xlu0 %1184
    %v1187 = vsel %vm195, %v1151, %v1177
    %v1188 = vsel %vm512, %v1187, %v1181
    %v1189 = vsel %vm514, %v1188, %v1185
    %v1190 = vpack.c.bf16 %v1189, %v1174
    %s1191 = scalar_lea.vmem [#allocation5], 16
    %v1192 = vld [vmem:[%s1191] sm:$0xf]
    %v1193 = vld [vmem:[%s1191 + $0x4] sm:$0xf]
    %v1194 = vld [vmem:[%s1191 + $0x8] sm:$0xf]
    %v1195 = vld [vmem:[%s1191 + $0xc] sm:$0xf]
    %v1196 = vperm.slane %v769, 0
    %v1201 = vunpack.c.l.b16 %v1192
    %v1202 = vunpack.c.l.b16 %v1193
    %v1203 = vunpack.c.l.b16 %v1194
    %v1204 = vunpack.c.l.b16 %v1195
    %v1205 = vpack.c.b16 %v1202, %v1201
    %v1206 = vpack.c.b16 %v1204, %v1203
    %v1210 = vsel %vm129, %v1190, 0
    %1212 = vmatpush.bf16.msra.mxu0 0
    %1213 = vmatpush.bf16.msra.mxu0 0
    %1214 = vmatpush.bf16.msra.mxu0 0
    %1215 = vmatpush.bf16.msra.mxu0 0
    %1216 = vmatpush.bf16.msra.mxu0 0
    %1217 = vmatpush.bf16.msra.mxu0 0
    %1218 = vmatpush.bf16.msra.mxu0 %v1206
    %1219 = vmatpush.bf16.msra.mxu0 %v1205
    %1220 = vmatmul.bf16.gmra.mxu0 %v1210
    %v1221 = vpop.f32.mrf.mxu0
    %v1222 = vadd.f32 %v1196, %v1221
    %v1223 = vpop.f32.mrf.mxu0
    %v1224 = vadd.f32 %v1196, %v1223
    %1225 = vdwg.mxu0
    %v1226 = vadd.f32 %v766, %v1222
    %v1227 = vadd.f32 %v767, %v1224
    %v1228 = vsel %vm129, %v1226, 0.0
    %1229 = vadd.xlane.f32.xlu0 %v1228
    %v1230 = vpop.xlane.xlu0 %1229
    %v1231 = vsel %vm129, %v1227, 0.0
    %1232 = vadd.xlane.f32.xlu0 %v1231
    %v1233 = vpop.xlane.xlu0 %1232
    %v1234 = vmul.f32 %v1230, %v580
    %v1235 = vmul.f32 %v1233, %v580
    %v1236 = vsub.f32 %v1226, %v1234
    %v1237 = vsub.f32 %v1227, %v1235
    %v1238 = vmul.f32 %v1236, %v1236
    %v1239 = vmul.f32 %v1237, %v1237
    %v1240 = vsel %vm129, %v1238, 0.0
    %1241 = vadd.xlane.f32.xlu0 %v1240
    %v1242 = vpop.xlane.xlu0 %1241
    %v1243 = vsel %vm129, %v1239, 0.0
    %1244 = vadd.xlane.f32.xlu0 %v1243
    %v1245 = vpop.xlane.xlu0 %1244
    %v1246 = vmul.f32 %v1242, %v580
    %v1247 = vmul.f32 %v1245, %v580
    %v1248 = vadd.f32 %v1246, 1e-05
    %v1249 = vadd.f32 %v1247, 1e-05
    %v1250 = vrsqrt.pop %v1248
    %v1251 = vmul.f32 %v1250, %v1248
    %v1252 = vmul.f32 %v1251, %v1250
    %v1253 = vmul.f32 0.5, %v1252
    %v1254 = vsub.f32 1.5, %v1253
    %v1255 = vmul.f32 %v1250, %v1254
    %vm1256 = vweird.f32 %v1248
    %vm1257 = vweird.f32 %v1250
    %vm1258 = vmor %vm1256, %vm1257
    %v1259 = vsel %vm1258, %v1250, %v1255
    %v1260 = vrsqrt.pop %v1249
    %v1261 = vmul.f32 %v1260, %v1249
    %v1262 = vmul.f32 %v1261, %v1260
    %v1263 = vmul.f32 0.5, %v1262
    %v1264 = vsub.f32 1.5, %v1263
    %v1265 = vmul.f32 %v1260, %v1264
    %vm1266 = vweird.f32 %v1249
    %vm1267 = vweird.f32 %v1260
    %vm1268 = vmor %vm1266, %vm1267
    %v1269 = vsel %vm1268, %v1260, %v1265
    %v1270 = vmul.f32 %v1236, %v1259
    %v1271 = vmul.f32 %v1237, %v1269
    %v1272 = vperm.slane %v769, 1
    %v1273 = vmul.f32 %v1270, %v1272
    %v1274 = vmul.f32 %v1271, %v1272
    %v1275 = vperm.slane %v769, 2
    %v1276 = vadd.f32 %v1273, %v1275
    %v1277 = vadd.f32 %v1274, %v1275
    %v1278 = vpack.c.bf16 %v1277, %v1276
    %s1279 = scalar_lea.vmem [#allocation7], 16
    %v1280 = vld [vmem:[%s1279] sm:$0xf]
    %v1281 = vld [vmem:[%s1279 + $0x4] sm:$0xf]
    %v1282 = vld [vmem:[%s1279 + $0x8] sm:$0xf]
    %v1283 = vld [vmem:[%s1279 + $0xc] sm:$0xf]
    %s1284 = scalar_lea.vmem [#allocation8], 1
    %v1285 = vld [vmem:[%s1284] sm:$0x1]
    %v1287 = vperm.slane %v1285, 0
    %v1293 = vunpack.c.l.b16 %v1280
    %v1294 = vunpack.c.l.b16 %v1281
    %v1295 = vunpack.c.l.b16 %v1282
    %v1296 = vunpack.c.l.b16 %v1283
    %v1297 = vpack.c.b16 %v1294, %v1293
    %v1298 = vpack.c.b16 %v1296, %v1295
    %v1302 = vsel %vm129, %v1278, 0
    %1304 = vmatpush.bf16.msra.mxu0 0
    %1305 = vmatpush.bf16.msra.mxu0 0
    %1306 = vmatpush.bf16.msra.mxu0 0
    %1307 = vmatpush.bf16.msra.mxu0 0
    %1308 = vmatpush.bf16.msra.mxu0 0
    %1309 = vmatpush.bf16.msra.mxu0 0
    %1310 = vmatpush.bf16.msra.mxu0 %v1298
    %1311 = vmatpush.bf16.msra.mxu0 %v1297
    %1312 = vmatmul.bf16.gmra.mxu0 %v1302
    %v1313 = vpop.f32.mrf.mxu0
    %v1314 = vadd.f32 %v1287, %v1313
    %v1315 = vpop.f32.mrf.mxu0
    %v1316 = vadd.f32 %v1287, %v1315
    %1317 = vdwg.mxu0
    %v1318 = vmax.f32 %v1314, 0.0
    %v1319 = vmax.f32 %v1316, 0.0
    %v1320 = vpack.c.bf16 %v1319, %v1318
    %s1321 = scalar_lea.vmem %s7, 32
    %v1322 = vld [vmem:[%s1321] sm:$0xf]
    %v1323 = vld [vmem:[%s1321 + $0x4] sm:$0xf]
    %v1324 = vld [vmem:[%s1321 + $0x8] sm:$0xf]
    %v1325 = vld [vmem:[%s1321 + $0xc] sm:$0xf]
    %v1326 = vld [vmem:[%s1321 + $0x10] sm:$0xf]
    %v1327 = vld [vmem:[%s1321 + $0x14] sm:$0xf]
    %v1328 = vld [vmem:[%s1321 + $0x18] sm:$0xf]
    %v1329 = vld [vmem:[%s1321 + $0x1c] sm:$0xf]
    %v1330 = vperm.slane %v769, 3
    %v1339 = vunpack.c.l.b16 %v1322
    %v1340 = vunpack.c.l.b16 %v1323
    %v1341 = vunpack.c.l.b16 %v1324
    %v1342 = vunpack.c.l.b16 %v1325
    %v1343 = vunpack.c.l.b16 %v1326
    %v1344 = vunpack.c.l.b16 %v1327
    %v1345 = vunpack.c.l.b16 %v1328
    %v1346 = vunpack.c.l.b16 %v1329
    %v1347 = vpack.c.b16 %v1340, %v1339
    %v1348 = vpack.c.b16 %v1342, %v1341
    %v1349 = vpack.c.b16 %v1344, %v1343
    %v1350 = vpack.c.b16 %v1346, %v1345
    %v1356 = vsel %vm249, %v1320, 0
    %1358 = vmatpush.bf16.msra.mxu0 0
    %1359 = vmatpush.bf16.msra.mxu0 0
    %1360 = vmatpush.bf16.msra.mxu0 0
    %1361 = vmatpush.bf16.msra.mxu0 0
    %1362 = vmatpush.bf16.msra.mxu0 %v1350
    %1363 = vmatpush.bf16.msra.mxu0 %v1349
    %1364 = vmatpush.bf16.msra.mxu0 %v1348
    %1365 = vmatpush.bf16.msra.mxu0 %v1347
    %1366 = vmatmul.bf16.gmra.mxu0 %v1356
    %v1367 = vpop.f32.mrf.mxu0
    %v1368 = vadd.f32 %v1330, %v1367
    %v1369 = vpop.f32.mrf.mxu0
    %v1370 = vadd.f32 %v1330, %v1369
    %1371 = vdwg.mxu0
    %v1372 = vadd.f32 %v1276, %v1368
    %v1373 = vadd.f32 %v1277, %v1370
    %v1374 = vsel %vm129, %v1372, 0.0
    %1375 = vadd.xlane.f32.xlu0 %v1374
    %v1376 = vpop.xlane.xlu0 %1375
    %v1377 = vsel %vm129, %v1373, 0.0
    %1378 = vadd.xlane.f32.xlu0 %v1377
    %v1379 = vpop.xlane.xlu0 %1378
    %v1380 = vmul.f32 %v1376, %v580
    %v1381 = vmul.f32 %v1379, %v580
    %v1382 = vsub.f32 %v1372, %v1380
    %v1383 = vsub.f32 %v1373, %v1381
    %v1384 = vmul.f32 %v1382, %v1382
    %v1385 = vmul.f32 %v1383, %v1383
    %v1386 = vsel %vm129, %v1384, 0.0
    %1387 = vadd.xlane.f32.xlu0 %v1386
    %v1388 = vpop.xlane.xlu0 %1387
    %v1389 = vsel %vm129, %v1385, 0.0
    %1390 = vadd.xlane.f32.xlu0 %v1389
    %v1391 = vpop.xlane.xlu0 %1390
    %v1392 = vmul.f32 %v1388, %v580
    %v1393 = vmul.f32 %v1391, %v580
    %v1394 = vadd.f32 %v1392, 1e-05
    %v1395 = vadd.f32 %v1393, 1e-05
    %v1396 = vrsqrt.pop %v1394
    %v1397 = vmul.f32 %v1396, %v1394
    %v1398 = vmul.f32 %v1397, %v1396
    %v1399 = vmul.f32 0.5, %v1398
    %v1400 = vsub.f32 1.5, %v1399
    %v1401 = vmul.f32 %v1396, %v1400
    %vm1402 = vweird.f32 %v1394
    %vm1403 = vweird.f32 %v1396
    %vm1404 = vmor %vm1402, %vm1403
    %v1405 = vsel %vm1404, %v1396, %v1401
    %v1406 = vrsqrt.pop %v1395
    %v1407 = vmul.f32 %v1406, %v1395
    %v1408 = vmul.f32 %v1407, %v1406
    %v1409 = vmul.f32 0.5, %v1408
    %v1410 = vsub.f32 1.5, %v1409
    %v1411 = vmul.f32 %v1406, %v1410
    %vm1412 = vweird.f32 %v1395
    %vm1413 = vweird.f32 %v1406
    %vm1414 = vmor %vm1412, %vm1413
    %v1415 = vsel %vm1414, %v1406, %v1411
    %v1416 = vmul.f32 %v1382, %v1405
    %v1417 = vmul.f32 %v1383, %v1415
    %v1418 = vperm.slane %v769, 4
    %v1419 = vmul.f32 %v1416, %v1418
    %v1420 = vmul.f32 %v1417, %v1418
    %v1421 = vperm.slane %v769, 5
    %v1422 = vadd.f32 %v1419, %v1421
    %v1423 = vadd.f32 %v1420, %v1421
    %1424 = vst.msk [vmem:[#allocation10] sm:$0xff] %vm129, %v1422
    %1425 = vst.msk [vmem:[#allocation10 + $0x8] sm:$0xff] %vm129, %v1423
    // Predicated region
    $region54: #{tpu_custom_call.1} parent=1 // pred_check
      _
    $region55: #{tpu_custom_call.1} parent=1 // pred_check_branch
      %1427 = sbr.rel (0) target = $region57
    $region56: #{tpu_custom_call.1} parent=1 // pred_region
      %1429 = vsyncadd [#allocation4], 0
      %s1430 = sshll.u32 [#allocation10], 4
      %s1431 = int_to_ptr.vmem [resolvable:$true] %s1430
      %s1432 = sshll.u32 %s9, 4
      %s1433 = int_to_ptr.hbm [resolvable:$true] %s1432
      %1438 = dma.vmem_to_hbm [thread:$0]  %s1431, 256, %s1433, [#allocation4], 128, 128, 8
    $region57: #{tpu_custom_call.1} parent=1 // pred_fallthru
      _
    // Predicated region
    $region58: #{tpu_custom_call.1} parent=1 // pred_check
      _
    $region59: #{tpu_custom_call.1} parent=1 // pred_check_branch
      %1440 = sbr.rel (0) target = $region61
    $region60: #{tpu_custom_call.1} parent=1 // pred_region
      %1442 = dma.done [#allocation4], 256
    $region61: #{tpu_custom_call.1} parent=1 // pred_fallthru
      _
    %1443 = vsyncpa [#allocation3], 1
    %1444 = vsyncpa [#allocation6], 1
    %1445 = vsyncpa [#allocation9], 1
    %1446 = vsyncpa [#allocation4], 1

</llo_original>
